<compile_context>
chip_gen: v5e
topology: v5e:2x2
jax: 0.10.0
libtpu: 0.0.40
codegen_flags: <defaults>
</compile_context>

<pallas_src>
import functools

import jax
import jax.numpy as jnp
from jax import lax
from jax.experimental import pallas as pl
from jax.experimental.pallas import tpu as pltpu


def _largest_divisor_leq(n, cap):
    for c in range(min(n, cap), 0, -1):
        if n % c == 0:
            return c
    return 1


def _gru_decoder_kernel(emb_ref, h0_ref, w_ih_ref, b_gi_ref, w_hh_ref, b_hn_ref,
                        w_out_ref, b_out_ref,
                        hid_ref, logits_ref,
                        gi_ref, hids_ref, hcar_ref,
                        *, t_chunk, b_chunk, hidden_size, emb_dim):
    """One (batch_chunk, time_chunk) grid step of the GRU decoder.

    Shapes (VMEM blocks, time-major):
      emb_ref    : (Tc, Bc, D)   bf16
      h0_ref     : (Bc, H)       f32   initial hidden for this batch chunk
      w_ih_ref   : (D, 3H)       bf16  gate order [r | z | n]
      b_gi_ref   : (1, 3H)       f32   = b_ih + [b_hr, b_hz, 0]   (folded)
      w_hh_ref   : (H, 3H)       bf16
      b_hn_ref   : (1, H)        f32
      w_out_ref  : (H, D)        bf16
      b_out_ref  : (1, D)        f32
      hid_ref    : (Tc, Bc, H)   f32   output hiddens
      logits_ref : (Tc, Bc, D)   f32   output logits
      gi_ref     : (Tc, Bc, 3H)  f32   scratch: fused input pre-activations
      hids_ref   : (Tc, Bc, H)   f32   scratch: per-step hiddens (avoids output read-back)
      hcar_ref   : (Bc, H)       f32   scratch: hidden carried across time chunks
    """
    Tc, Bc, H, D = t_chunk, b_chunk, hidden_size, emb_dim
    t_idx = pl.program_id(1)

    # ---- init the carried hidden state at the first time chunk of this batch chunk ----
    @pl.when(t_idx == 0)
    def _():
        hcar_ref[...] = h0_ref[...]

    # ---- Phase 1: fused input projection for the whole chunk (one MXU matmul) ----
    emb2d = emb_ref[...].reshape(Tc * Bc, D)                        # bf16, layout-free reshape
    gi2d = (jnp.dot(emb2d, w_ih_ref[...], preferred_element_type=jnp.float32)
            + b_gi_ref[...])                                        # (Tc*Bc, 3H) f32
    gi_ref[...] = gi2d.reshape(Tc, Bc, 3 * H)

    # Loop constants (loaded / broadcast once).
    w_hh = w_hh_ref[...]                                            # (H, 3H) bf16
    b_hn = jnp.broadcast_to(b_hn_ref[...], (Bc, H))                 # hoisted broadcast

    # ---- Phase 2: serial time recurrence (single fused matmul per step) ----
    def step(t, h):
        gi_t = gi_ref[t]                                            # (Bc, 3H), leading-axis index
        gh = jnp.dot(h.astype(jnp.bfloat16), w_hh,
                     preferred_element_type=jnp.float32)            # (Bc, 3H)
        r = jax.nn.sigmoid(gi_t[:, :H] + gh[:, :H])
        z = jax.nn.sigmoid(gi_t[:, H:2 * H] + gh[:, H:2 * H])
        n = jnp.tanh(gi_t[:, 2 * H:] + r * (gh[:, 2 * H:] + b_hn))
        h_new = (1.0 - z) * n + z * h
        hids_ref[t] = h_new
        return h_new

    unroll = True if (Tc <= 8 and H <= 256) else 2
    h_last = lax.fori_loop(0, Tc, step, hcar_ref[...], unroll=unroll)
    hcar_ref[...] = h_last                                          # carry to next time chunk

    # ---- Phase 3: fused output projection + tanh for the whole chunk ----
    hid2d = hids_ref[...].reshape(Tc * Bc, H)
    logits2d = jnp.tanh(
        jnp.dot(hid2d.astype(jnp.bfloat16), w_out_ref[...],
                preferred_element_type=jnp.float32) + b_out_ref[...])
    hid_ref[...] = hids_ref[...].astype(hid_ref.dtype)
    logits_ref[...] = logits2d.reshape(Tc, Bc, D).astype(logits_ref.dtype)


def disentangle_rnn_decoder_forward(y, hidden, params, *, tc=None, bc=None):
    """JAX wrapper reproducing DisentangleRNNDecoder.forward(y, hidden, one_step=False)."""
    emb_tbl = params["embedding"]           # (n_words, D)
    B, T = y.shape
    D = emb_tbl.shape[1]
    H = hidden.shape[1]

    # Time-major embedding gather: the gather output feeds the kernel directly.
    emb_tm = jnp.take(emb_tbl, y.T, axis=0)            # (T, B, D) f32

    # Pad batch to a multiple of 16 (bf16 sublane packing) -> aligned tiles & free reshapes.
    Bp = -(-B // 16) * 16
    if Bp != B:
        emb_tm_p = jnp.pad(emb_tm, ((0, 0), (0, Bp - B), (0, 0)))
        hidden_p = jnp.pad(hidden, ((0, Bp - B), (0, 0)))
    else:
        emb_tm_p, hidden_p = emb_tm, hidden
    emb_in = emb_tm_p.astype(jnp.bfloat16)
    h0 = hidden_p.astype(jnp.float32)

    # Fused-gate weights (bf16 MXU inputs) and folded biases (f32).
    w_ih = params["w_ih"].astype(jnp.bfloat16)          # (D, 3H) columns [r | z | n]
    w_hh = params["w_hh"].astype(jnp.bfloat16)          # (H, 3H)
    w_out = params["w_out"].astype(jnp.bfloat16)        # (H, D)
    b_ih = params["b_ih"].astype(jnp.float32)           # (3H,)
    b_hh = params["b_hh"].astype(jnp.float32)           # (3H,)
    b_gi = (b_ih + jnp.concatenate([b_hh[:2 * H], jnp.zeros((H,), jnp.float32)])
            ).reshape(1, 3 * H)                         # fold b_hr, b_hz into gi
    b_hn = b_hh[2 * H:].reshape(1, H)                   # must stay inside r*(...)
    b_out = params["b_out"].astype(jnp.float32).reshape(1, D)

    # Chunk sizes.
    Tc = tc if tc is not None else _largest_divisor_leq(T, 128)
    Bc = bc if bc is not None else Bp
    assert T % Tc == 0 and Bp % Bc == 0 and Bc % 8 == 0
    nt, nb = T // Tc, Bp // Bc

    kernel = functools.partial(_gru_decoder_kernel, t_chunk=Tc, b_chunk=Bc,
                               hidden_size=H, emb_dim=D)

    out_shapes = (
        jax.ShapeDtypeStruct((T, Bp, H), jnp.float32),  # hiddens (time-major)
        jax.ShapeDtypeStruct((T, Bp, D), jnp.float32),  # logits  (time-major)
    )

    grid_spec = pltpu.PrefetchScalarGridSpec(
        num_scalar_prefetch=0,
        grid=(nb, nt),                                            # time is the inner (carried) axis
        in_specs=[
            pl.BlockSpec((Tc, Bc, D), lambda b, t: (t, b, 0)),    # emb chunk (bf16)
            pl.BlockSpec((Bc, H), lambda b, t: (b, 0)),           # h0
            pl.BlockSpec((D, 3 * H), lambda b, t: (0, 0)),        # W_ih (fused gates)
            pl.BlockSpec((1, 3 * H), lambda b, t: (0, 0)),        # folded gi bias
            pl.BlockSpec((H, 3 * H), lambda b, t: (0, 0)),        # W_hh (fused gates)
            pl.BlockSpec((1, H), lambda b, t: (0, 0)),            # b_hn
            pl.BlockSpec((H, D), lambda b, t: (0, 0)),            # W_out
            pl.BlockSpec((1, D), lambda b, t: (0, 0)),            # b_out
        ],
        out_specs=[
            pl.BlockSpec((Tc, Bc, H), lambda b, t: (t, b, 0)),
            pl.BlockSpec((Tc, Bc, D), lambda b, t: (t, b, 0)),
        ],
        scratch_shapes=[
            pltpu.VMEM((Tc, Bc, 3 * H), jnp.float32),             # gi
            pltpu.VMEM((Tc, Bc, H), jnp.float32),                 # per-chunk hiddens
            pltpu.VMEM((Bc, H), jnp.float32),                     # carried hidden state
        ],
    )

    # Explicit VMEM budget sized to the per-chunk working set (with double-buffering).
    est = (2 * (Tc * Bc * D * 2 + Tc * Bc * (H + D) * 4 + Bc * H * 4)      # in/out blocks
           + (D * 3 * H + H * 3 * H + H * D) * 2 + (4 * H + D) * 4         # weights/biases
           + (Tc * Bc * 4 * H + Bc * H) * 4)                               # scratches
    vmem_limit = int(min(48 << 20, max(16 << 20, 2 * est + (4 << 20))))

    flops = 2 * T * Bp * (D * 3 * H + H * 3 * H + H * D)
    transcendentals = T * Bp * (3 * H + D)
    bytes_accessed = (T * Bp * D * 2 + (D * 3 * H + H * 3 * H + H * D) * 2
                      + Bp * H * 4 + T * Bp * (H + D) * 4)
    cost = pl.CostEstimate(flops=flops, transcendentals=transcendentals,
                           bytes_accessed=bytes_accessed)

    hid_tm, logits_tm = pl.pallas_call(
        kernel,
        out_shape=out_shapes,
        grid_spec=grid_spec,
        compiler_params=pltpu.CompilerParams(
            dimension_semantics=("parallel", "arbitrary"),  # batch parallel, time serial
            vmem_limit_bytes=vmem_limit),
        cost_estimate=cost,
    )(emb_in, h0, w_ih, b_gi, w_hh, b_hn, w_out, b_out)

    hiddens = jnp.transpose(hid_tm[:, :B, :], (1, 0, 2))      # (B, T, H)
    logits = jnp.transpose(logits_tm[:, :B, :], (1, 0, 2))    # (B, T, D)
    embeddings = jnp.transpose(emb_tm, (1, 0, 2))             # (B, T, D), exact f32
    return {"logits": logits, "hiddens": hiddens, "embeddings": embeddings}


def _reference_forward(y, hidden, params):
    """Pure-JAX reference for correctness checking."""
    emb = jnp.take(params["embedding"], y, axis=0)  # (B, T, D)
    H = hidden.shape[1]

    def step(h, x_t):
        gi = x_t @ params["w_ih"] + params["b_ih"]
        gh = h @ params["w_hh"] + params["b_hh"]
        r = jax.nn.sigmoid(gi[:, :H] + gh[:, :H])
        z = jax.nn.sigmoid(gi[:, H:2 * H] + gh[:, H:2 * H])
        n = jnp.tanh(gi[:, 2 * H:] + r * gh[:, 2 * H:])
        h_new = (1.0 - z) * n + z * h
        return h_new, h_new

    _, hs = lax.scan(step, hidden, jnp.transpose(emb, (1, 0, 2)))
    hiddens = jnp.transpose(hs, (1, 0, 2))
    logits = jnp.tanh(hiddens @ params["w_out"] + params["b_out"])
    return {"logits": logits, "hiddens": hiddens, "embeddings": emb}


if __name__ == "__main__":
    # Small, deterministic config: n_words=50, input_size=D=32, hidden_size=H=32.
    n_words, D, H = 50, 32, 32
    B, T = 2, 8

    key = jax.random.PRNGKey(0)
    keys = jax.random.split(key, 8)
    params = {
        "embedding": 0.1 * jax.random.normal(keys[0], (n_words, D), jnp.float32),
        "w_ih": 0.1 * jax.random.normal(keys[1], (D, 3 * H), jnp.float32),
        "w_hh": 0.1 * jax.random.normal(keys[2], (H, 3 * H), jnp.float32),
        "b_ih": 0.1 * jax.random.normal(keys[3], (3 * H,), jnp.float32),
        "b_hh": 0.1 * jax.random.normal(keys[4], (3 * H,), jnp.float32),
        "w_out": 0.1 * jax.random.normal(keys[5], (H, D), jnp.float32),
        "b_out": 0.1 * jax.random.normal(keys[6], (D,), jnp.float32),
    }

    y = jax.random.randint(keys[7], (B, T), 0, n_words, dtype=jnp.int32)
    hidden0 = jnp.zeros((B, H), jnp.float32)  # == init_decoder(y)

    # tc=4 -> two time chunks, exercising the carried hidden-state scratch across grid steps.
    out = disentangle_rnn_decoder_forward(y, hidden0, params, tc=4)
    jax.block_until_ready(out)

    ref = _reference_forward(y, hidden0, params)
    for k in ("logits", "hiddens", "embeddings"):
        assert out[k].shape == ref[k].shape, (k, out[k].shape, ref[k].shape)
        assert jnp.allclose(out[k], ref[k], rtol=1e-2, atol=1e-2), f"mismatch in {k}"

    print("KERNEL_OK")
</pallas_src>

<mosaic_0001>
module attributes {stable_mosaic.version = 11 : i64} {
  func.func @_gru_decoder_kernel(%arg0: i32, %arg1: i32, %arg2: memref<4x16x32xbf16, #tpu.memory_space<vmem>>, %arg3: memref<16x32xf32, #tpu.memory_space<vmem>>, %arg4: memref<32x96xbf16, #tpu.memory_space<vmem>>, %arg5: memref<1x96xf32, #tpu.memory_space<vmem>>, %arg6: memref<32x96xbf16, #tpu.memory_space<vmem>>, %arg7: memref<1x32xf32, #tpu.memory_space<vmem>>, %arg8: memref<32x32xbf16, #tpu.memory_space<vmem>>, %arg9: memref<1x32xf32, #tpu.memory_space<vmem>>, %arg10: memref<4x16x32xf32, #tpu.memory_space<vmem>>, %arg11: memref<4x16x32xf32, #tpu.memory_space<vmem>>, %arg12: memref<4x16x96xf32, #tpu.memory_space<vmem>>, %arg13: memref<4x16x32xf32, #tpu.memory_space<vmem>>, %arg14: memref<16x32xf32, #tpu.memory_space<vmem>>) attributes {dimension_semantics = [#tpu.dimension_semantics<parallel>, #tpu.dimension_semantics<arbitrary>], iteration_bounds = array<i64: 1, 2>, scalar_prefetch = 0 : i64, scratch_operands = 3 : i64, tpu.core_type = #tpu.core_type<tc>, window_params = [{transform_indices = @transform_0, window_bounds = array<i64: 4, 16, 32>}, {transform_indices = @transform_1, window_bounds = array<i64: 16, 32>}, {pipeline_mode = #tpu.pipeline_mode<synchronous>, transform_indices = @transform_2, window_bounds = array<i64: 32, 96>}, {pipeline_mode = #tpu.pipeline_mode<synchronous>, transform_indices = @transform_3, window_bounds = array<i64: 1, 96>}, {pipeline_mode = #tpu.pipeline_mode<synchronous>, transform_indices = @transform_4, window_bounds = array<i64: 32, 96>}, {pipeline_mode = #tpu.pipeline_mode<synchronous>, transform_indices = @transform_5, window_bounds = array<i64: 1, 32>}, {pipeline_mode = #tpu.pipeline_mode<synchronous>, transform_indices = @transform_6, window_bounds = array<i64: 32, 32>}, {pipeline_mode = #tpu.pipeline_mode<synchronous>, transform_indices = @transform_7, window_bounds = array<i64: 1, 32>}, {transform_indices = @transform_8, window_bounds = array<i64: 4, 16, 32>}, {transform_indices = @transform_9, window_bounds = array<i64: 4, 16, 32>}]} {
    %c0_i32 = arith.constant 0 : i32
    %0 = arith.cmpi eq, %arg1, %c0_i32 : i32
    %1 = arith.extui %0 : i1 to i32
    %c0_i32_0 = arith.constant 0 : i32
    %2 = arith.cmpi ne, %1, %c0_i32_0 : i32
    scf.if %2 {
      %c0_68 = arith.constant 0 : index
      %c0_69 = arith.constant 0 : index
      %175 = vector.load %arg3[%c0_68, %c0_69] : memref<16x32xf32, #tpu.memory_space<vmem>>, vector<16x32xf32>
      %c0_70 = arith.constant 0 : index
      %c0_71 = arith.constant 0 : index
      %176 = vector.load %arg14[%c0_70, %c0_71] : memref<16x32xf32, #tpu.memory_space<vmem>>, vector<16x32xf32>
      tpu.vector_store %arg14[%c0_70, %c0_71], %175 {strides = array<i32>} : memref<16x32xf32, #tpu.memory_space<vmem>>, vector<16x32xf32>,
    } else {
    }
    %c0 = arith.constant 0 : index
    %c0_1 = arith.constant 0 : index
    %c0_2 = arith.constant 0 : index
    %3 = vector.load %arg2[%c0, %c0_1, %c0_2] : memref<4x16x32xbf16, #tpu.memory_space<vmem>>, vector<4x16x32xbf16>
    %4 = vector.shape_cast %3 : vector<4x16x32xbf16> to vector<64x32xbf16>
    %c0_3 = arith.constant 0 : index
    %c0_4 = arith.constant 0 : index
    %5 = vector.load %arg4[%c0_3, %c0_4] : memref<32x96xbf16, #tpu.memory_space<vmem>>, vector<32x96xbf16>
    %cst = arith.constant dense<0.000000e+00> : vector<64x96xf32>
    %6 = tpu.matmul %4, %5, %cst {dimension_numbers = #tpu.dot_dimension_numbers<[1], [0], [0], [1], [0, 0, 1, 1], [], []>} : vector<64x32xbf16>, vector<32x96xbf16>, vector<64x96xf32> -> vector<64x96xf32>
    %c0_5 = arith.constant 0 : index
    %c0_6 = arith.constant 0 : index
    %7 = vector.load %arg5[%c0_5, %c0_6] : memref<1x96xf32, #tpu.memory_space<vmem>>, vector<1x96xf32>
    %8 = vector.broadcast %7 : vector<1x96xf32> to vector<64x96xf32>
    %9 = arith.addf %6, %8 : vector<64x96xf32>
    %10 = vector.shape_cast %9 : vector<64x96xf32> to vector<4x16x96xf32>
    %c0_7 = arith.constant 0 : index
    %c0_8 = arith.constant 0 : index
    %c0_9 = arith.constant 0 : index
    %11 = vector.load %arg12[%c0_7, %c0_8, %c0_9] : memref<4x16x96xf32, #tpu.memory_space<vmem>>, vector<4x16x96xf32>
    tpu.vector_store %arg12[%c0_7, %c0_8, %c0_9], %10 {strides = array<i32>} : memref<4x16x96xf32, #tpu.memory_space<vmem>>, vector<4x16x96xf32>,
    %c0_10 = arith.constant 0 : index
    %c0_11 = arith.constant 0 : index
    %12 = vector.load %arg6[%c0_10, %c0_11] : memref<32x96xbf16, #tpu.memory_space<vmem>>, vector<32x96xbf16>
    %c0_12 = arith.constant 0 : index
    %c0_13 = arith.constant 0 : index
    %13 = vector.load %arg7[%c0_12, %c0_13] : memref<1x32xf32, #tpu.memory_space<vmem>>, vector<1x32xf32>
    %14 = vector.shape_cast %13 : vector<1x32xf32> to vector<1x32xf32>
    %15 = vector.broadcast %14 : vector<1x32xf32> to vector<16x32xf32>
    %c0_14 = arith.constant 0 : index
    %c0_15 = arith.constant 0 : index
    %16 = vector.load %arg14[%c0_14, %c0_15] : memref<16x32xf32, #tpu.memory_space<vmem>>, vector<16x32xf32>
    %c0_i32_16 = arith.constant 0 : i32
    %17 = arith.index_cast %c0_i32_16 : i32 to index
    %c0_17 = arith.constant 0 : index
    %c0_18 = arith.constant 0 : index
    %18 = vector.load %arg12[%17, %c0_17, %c0_18] : memref<4x16x96xf32, #tpu.memory_space<vmem>>, vector<1x16x96xf32>
    %19 = vector.shape_cast %18 : vector<1x16x96xf32> to vector<16x96xf32>
    %20 = arith.truncf %16 : vector<16x32xf32> to vector<16x32xbf16>
    %cst_19 = arith.constant dense<0.000000e+00> : vector<16x96xf32>
    %21 = tpu.matmul %20, %12, %cst_19 {dimension_numbers = #tpu.dot_dimension_numbers<[1], [0], [0], [1], [0, 0, 1, 1], [], []>} : vector<16x32xbf16>, vector<32x96xbf16>, vector<16x96xf32> -> vector<16x96xf32>
    %22 = vector.extract_strided_slice %19 {offsets = [0, 0], sizes = [16, 32], strides = [1, 1]} : vector<16x96xf32> to vector<16x32xf32>
    %23 = vector.extract_strided_slice %21 {offsets = [0, 0], sizes = [16, 32], strides = [1, 1]} : vector<16x96xf32> to vector<16x32xf32>
    %24 = arith.addf %22, %23 : vector<16x32xf32>
    %25 = arith.negf %24 : vector<16x32xf32>
    %26 = math.exp %25 : vector<16x32xf32>
    %cst_20 = arith.constant 1.000000e+00 : f32
    %27 = vector.broadcast %cst_20 : f32 to vector<16x32xf32>
    %28 = arith.addf %27, %26 : vector<16x32xf32>
    %29 = arith.divf %27, %28 : vector<16x32xf32>
    %30 = vector.extract_strided_slice %19 {offsets = [0, 32], sizes = [16, 32], strides = [1, 1]} : vector<16x96xf32> to vector<16x32xf32>
    %31 = vector.extract_strided_slice %21 {offsets = [0, 32], sizes = [16, 32], strides = [1, 1]} : vector<16x96xf32> to vector<16x32xf32>
    %32 = arith.addf %30, %31 : vector<16x32xf32>
    %33 = arith.negf %32 : vector<16x32xf32>
    %34 = math.exp %33 : vector<16x32xf32>
    %cst_21 = arith.constant 1.000000e+00 : f32
    %35 = vector.broadcast %cst_21 : f32 to vector<16x32xf32>
    %36 = arith.addf %35, %34 : vector<16x32xf32>
    %37 = arith.divf %35, %36 : vector<16x32xf32>
    %38 = vector.extract_strided_slice %19 {offsets = [0, 64], sizes = [16, 32], strides = [1, 1]} : vector<16x96xf32> to vector<16x32xf32>
    %39 = vector.extract_strided_slice %21 {offsets = [0, 64], sizes = [16, 32], strides = [1, 1]} : vector<16x96xf32> to vector<16x32xf32>
    %40 = arith.addf %39, %15 : vector<16x32xf32>
    %41 = arith.mulf %29, %40 : vector<16x32xf32>
    %42 = arith.addf %38, %41 : vector<16x32xf32>
    %43 = math.tanh %42 : vector<16x32xf32>
    %cst_22 = arith.constant 1.000000e+00 : f32
    %44 = vector.broadcast %cst_22 : f32 to vector<16x32xf32>
    %45 = arith.subf %44, %37 : vector<16x32xf32>
    %46 = arith.mulf %45, %43 : vector<16x32xf32>
    %47 = arith.mulf %37, %16 : vector<16x32xf32>
    %48 = arith.addf %46, %47 : vector<16x32xf32>
    %49 = arith.index_cast %c0_i32_16 : i32 to index
    %c0_23 = arith.constant 0 : index
    %c0_24 = arith.constant 0 : index
    %50 = vector.load %arg13[%49, %c0_23, %c0_24] : memref<4x16x32xf32, #tpu.memory_space<vmem>>, vector<1x16x32xf32>
    %51 = vector.shape_cast %50 : vector<1x16x32xf32> to vector<16x32xf32>
    %52 = vector.shape_cast %48 : vector<16x32xf32> to vector<1x16x32xf32>
    tpu.vector_store %arg13[%49, %c0_23, %c0_24], %52 {strides = array<i32>} : memref<4x16x32xf32, #tpu.memory_space<vmem>>, vector<1x16x32xf32>,
    %c1_i32 = arith.constant 1 : i32
    %53 = arith.index_cast %c1_i32 : i32 to index
    %c0_25 = arith.constant 0 : index
    %c0_26 = arith.constant 0 : index
    %54 = vector.load %arg12[%53, %c0_25, %c0_26] : memref<4x16x96xf32, #tpu.memory_space<vmem>>, vector<1x16x96xf32>
    %55 = vector.shape_cast %54 : vector<1x16x96xf32> to vector<16x96xf32>
    %56 = arith.truncf %48 : vector<16x32xf32> to vector<16x32xbf16>
    %cst_27 = arith.constant dense<0.000000e+00> : vector<16x96xf32>
    %57 = tpu.matmul %56, %12, %cst_27 {dimension_numbers = #tpu.dot_dimension_numbers<[1], [0], [0], [1], [0, 0, 1, 1], [], []>} : vector<16x32xbf16>, vector<32x96xbf16>, vector<16x96xf32> -> vector<16x96xf32>
    %58 = vector.extract_strided_slice %55 {offsets = [0, 0], sizes = [16, 32], strides = [1, 1]} : vector<16x96xf32> to vector<16x32xf32>
    %59 = vector.extract_strided_slice %57 {offsets = [0, 0], sizes = [16, 32], strides = [1, 1]} : vector<16x96xf32> to vector<16x32xf32>
    %60 = arith.addf %58, %59 : vector<16x32xf32>
    %61 = arith.negf %60 : vector<16x32xf32>
    %62 = math.exp %61 : vector<16x32xf32>
    %cst_28 = arith.constant 1.000000e+00 : f32
    %63 = vector.broadcast %cst_28 : f32 to vector<16x32xf32>
    %64 = arith.addf %63, %62 : vector<16x32xf32>
    %65 = arith.divf %63, %64 : vector<16x32xf32>
    %66 = vector.extract_strided_slice %55 {offsets = [0, 32], sizes = [16, 32], strides = [1, 1]} : vector<16x96xf32> to vector<16x32xf32>
    %67 = vector.extract_strided_slice %57 {offsets = [0, 32], sizes = [16, 32], strides = [1, 1]} : vector<16x96xf32> to vector<16x32xf32>
    %68 = arith.addf %66, %67 : vector<16x32xf32>
    %69 = arith.negf %68 : vector<16x32xf32>
    %70 = math.exp %69 : vector<16x32xf32>
    %cst_29 = arith.constant 1.000000e+00 : f32
    %71 = vector.broadcast %cst_29 : f32 to vector<16x32xf32>
    %72 = arith.addf %71, %70 : vector<16x32xf32>
    %73 = arith.divf %71, %72 : vector<16x32xf32>
    %74 = vector.extract_strided_slice %55 {offsets = [0, 64], sizes = [16, 32], strides = [1, 1]} : vector<16x96xf32> to vector<16x32xf32>
    %75 = vector.extract_strided_slice %57 {offsets = [0, 64], sizes = [16, 32], strides = [1, 1]} : vector<16x96xf32> to vector<16x32xf32>
    %76 = arith.addf %75, %15 : vector<16x32xf32>
    %77 = arith.mulf %65, %76 : vector<16x32xf32>
    %78 = arith.addf %74, %77 : vector<16x32xf32>
    %79 = math.tanh %78 : vector<16x32xf32>
    %cst_30 = arith.constant 1.000000e+00 : f32
    %80 = vector.broadcast %cst_30 : f32 to vector<16x32xf32>
    %81 = arith.subf %80, %73 : vector<16x32xf32>
    %82 = arith.mulf %81, %79 : vector<16x32xf32>
    %83 = arith.mulf %73, %48 : vector<16x32xf32>
    %84 = arith.addf %82, %83 : vector<16x32xf32>
    %85 = arith.index_cast %c1_i32 : i32 to index
    %c0_31 = arith.constant 0 : index
    %c0_32 = arith.constant 0 : index
    %86 = vector.load %arg13[%85, %c0_31, %c0_32] : memref<4x16x32xf32, #tpu.memory_space<vmem>>, vector<1x16x32xf32>
    %87 = vector.shape_cast %86 : vector<1x16x32xf32> to vector<16x32xf32>
    %88 = vector.shape_cast %84 : vector<16x32xf32> to vector<1x16x32xf32>
    tpu.vector_store %arg13[%85, %c0_31, %c0_32], %88 {strides = array<i32>} : memref<4x16x32xf32, #tpu.memory_space<vmem>>, vector<1x16x32xf32>,
    %c2_i32 = arith.constant 2 : i32
    %89 = arith.index_cast %c2_i32 : i32 to index
    %c0_33 = arith.constant 0 : index
    %c0_34 = arith.constant 0 : index
    %90 = vector.load %arg12[%89, %c0_33, %c0_34] : memref<4x16x96xf32, #tpu.memory_space<vmem>>, vector<1x16x96xf32>
    %91 = vector.shape_cast %90 : vector<1x16x96xf32> to vector<16x96xf32>
    %92 = arith.truncf %84 : vector<16x32xf32> to vector<16x32xbf16>
    %cst_35 = arith.constant dense<0.000000e+00> : vector<16x96xf32>
    %93 = tpu.matmul %92, %12, %cst_35 {dimension_numbers = #tpu.dot_dimension_numbers<[1], [0], [0], [1], [0, 0, 1, 1], [], []>} : vector<16x32xbf16>, vector<32x96xbf16>, vector<16x96xf32> -> vector<16x96xf32>
    %94 = vector.extract_strided_slice %91 {offsets = [0, 0], sizes = [16, 32], strides = [1, 1]} : vector<16x96xf32> to vector<16x32xf32>
    %95 = vector.extract_strided_slice %93 {offsets = [0, 0], sizes = [16, 32], strides = [1, 1]} : vector<16x96xf32> to vector<16x32xf32>
    %96 = arith.addf %94, %95 : vector<16x32xf32>
    %97 = arith.negf %96 : vector<16x32xf32>
    %98 = math.exp %97 : vector<16x32xf32>
    %cst_36 = arith.constant 1.000000e+00 : f32
    %99 = vector.broadcast %cst_36 : f32 to vector<16x32xf32>
    %100 = arith.addf %99, %98 : vector<16x32xf32>
    %101 = arith.divf %99, %100 : vector<16x32xf32>
    %102 = vector.extract_strided_slice %91 {offsets = [0, 32], sizes = [16, 32], strides = [1, 1]} : vector<16x96xf32> to vector<16x32xf32>
    %103 = vector.extract_strided_slice %93 {offsets = [0, 32], sizes = [16, 32], strides = [1, 1]} : vector<16x96xf32> to vector<16x32xf32>
    %104 = arith.addf %102, %103 : vector<16x32xf32>
    %105 = arith.negf %104 : vector<16x32xf32>
    %106 = math.exp %105 : vector<16x32xf32>
    %cst_37 = arith.constant 1.000000e+00 : f32
    %107 = vector.broadcast %cst_37 : f32 to vector<16x32xf32>
    %108 = arith.addf %107, %106 : vector<16x32xf32>
    %109 = arith.divf %107, %108 : vector<16x32xf32>
    %110 = vector.extract_strided_slice %91 {offsets = [0, 64], sizes = [16, 32], strides = [1, 1]} : vector<16x96xf32> to vector<16x32xf32>
    %111 = vector.extract_strided_slice %93 {offsets = [0, 64], sizes = [16, 32], strides = [1, 1]} : vector<16x96xf32> to vector<16x32xf32>
    %112 = arith.addf %111, %15 : vector<16x32xf32>
    %113 = arith.mulf %101, %112 : vector<16x32xf32>
    %114 = arith.addf %110, %113 : vector<16x32xf32>
    %115 = math.tanh %114 : vector<16x32xf32>
    %cst_38 = arith.constant 1.000000e+00 : f32
    %116 = vector.broadcast %cst_38 : f32 to vector<16x32xf32>
    %117 = arith.subf %116, %109 : vector<16x32xf32>
    %118 = arith.mulf %117, %115 : vector<16x32xf32>
    %119 = arith.mulf %109, %84 : vector<16x32xf32>
    %120 = arith.addf %118, %119 : vector<16x32xf32>
    %121 = arith.index_cast %c2_i32 : i32 to index
    %c0_39 = arith.constant 0 : index
    %c0_40 = arith.constant 0 : index
    %122 = vector.load %arg13[%121, %c0_39, %c0_40] : memref<4x16x32xf32, #tpu.memory_space<vmem>>, vector<1x16x32xf32>
    %123 = vector.shape_cast %122 : vector<1x16x32xf32> to vector<16x32xf32>
    %124 = vector.shape_cast %120 : vector<16x32xf32> to vector<1x16x32xf32>
    tpu.vector_store %arg13[%121, %c0_39, %c0_40], %124 {strides = array<i32>} : memref<4x16x32xf32, #tpu.memory_space<vmem>>, vector<1x16x32xf32>,
    %c3_i32 = arith.constant 3 : i32
    %125 = arith.index_cast %c3_i32 : i32 to index
    %c0_41 = arith.constant 0 : index
    %c0_42 = arith.constant 0 : index
    %126 = vector.load %arg12[%125, %c0_41, %c0_42] : memref<4x16x96xf32, #tpu.memory_space<vmem>>, vector<1x16x96xf32>
    %127 = vector.shape_cast %126 : vector<1x16x96xf32> to vector<16x96xf32>
    %128 = arith.truncf %120 : vector<16x32xf32> to vector<16x32xbf16>
    %cst_43 = arith.constant dense<0.000000e+00> : vector<16x96xf32>
    %129 = tpu.matmul %128, %12, %cst_43 {dimension_numbers = #tpu.dot_dimension_numbers<[1], [0], [0], [1], [0, 0, 1, 1], [], []>} : vector<16x32xbf16>, vector<32x96xbf16>, vector<16x96xf32> -> vector<16x96xf32>
    %130 = vector.extract_strided_slice %127 {offsets = [0, 0], sizes = [16, 32], strides = [1, 1]} : vector<16x96xf32> to vector<16x32xf32>
    %131 = vector.extract_strided_slice %129 {offsets = [0, 0], sizes = [16, 32], strides = [1, 1]} : vector<16x96xf32> to vector<16x32xf32>
    %132 = arith.addf %130, %131 : vector<16x32xf32>
    %133 = arith.negf %132 : vector<16x32xf32>
    %134 = math.exp %133 : vector<16x32xf32>
    %cst_44 = arith.constant 1.000000e+00 : f32
    %135 = vector.broadcast %cst_44 : f32 to vector<16x32xf32>
    %136 = arith.addf %135, %134 : vector<16x32xf32>
    %137 = arith.divf %135, %136 : vector<16x32xf32>
    %138 = vector.extract_strided_slice %127 {offsets = [0, 32], sizes = [16, 32], strides = [1, 1]} : vector<16x96xf32> to vector<16x32xf32>
    %139 = vector.extract_strided_slice %129 {offsets = [0, 32], sizes = [16, 32], strides = [1, 1]} : vector<16x96xf32> to vector<16x32xf32>
    %140 = arith.addf %138, %139 : vector<16x32xf32>
    %141 = arith.negf %140 : vector<16x32xf32>
    %142 = math.exp %141 : vector<16x32xf32>
    %cst_45 = arith.constant 1.000000e+00 : f32
    %143 = vector.broadcast %cst_45 : f32 to vector<16x32xf32>
    %144 = arith.addf %143, %142 : vector<16x32xf32>
    %145 = arith.divf %143, %144 : vector<16x32xf32>
    %146 = vector.extract_strided_slice %127 {offsets = [0, 64], sizes = [16, 32], strides = [1, 1]} : vector<16x96xf32> to vector<16x32xf32>
    %147 = vector.extract_strided_slice %129 {offsets = [0, 64], sizes = [16, 32], strides = [1, 1]} : vector<16x96xf32> to vector<16x32xf32>
    %148 = arith.addf %147, %15 : vector<16x32xf32>
    %149 = arith.mulf %137, %148 : vector<16x32xf32>
    %150 = arith.addf %146, %149 : vector<16x32xf32>
    %151 = math.tanh %150 : vector<16x32xf32>
    %cst_46 = arith.constant 1.000000e+00 : f32
    %152 = vector.broadcast %cst_46 : f32 to vector<16x32xf32>
    %153 = arith.subf %152, %145 : vector<16x32xf32>
    %154 = arith.mulf %153, %151 : vector<16x32xf32>
    %155 = arith.mulf %145, %120 : vector<16x32xf32>
    %156 = arith.addf %154, %155 : vector<16x32xf32>
    %157 = arith.index_cast %c3_i32 : i32 to index
    %c0_47 = arith.constant 0 : index
    %c0_48 = arith.constant 0 : index
    %158 = vector.load %arg13[%157, %c0_47, %c0_48] : memref<4x16x32xf32, #tpu.memory_space<vmem>>, vector<1x16x32xf32>
    %159 = vector.shape_cast %158 : vector<1x16x32xf32> to vector<16x32xf32>
    %160 = vector.shape_cast %156 : vector<16x32xf32> to vector<1x16x32xf32>
    tpu.vector_store %arg13[%157, %c0_47, %c0_48], %160 {strides = array<i32>} : memref<4x16x32xf32, #tpu.memory_space<vmem>>, vector<1x16x32xf32>,
    %c4_i32 = arith.constant 4 : i32
    %c0_49 = arith.constant 0 : index
    %c0_50 = arith.constant 0 : index
    %161 = vector.load %arg14[%c0_49, %c0_50] : memref<16x32xf32, #tpu.memory_space<vmem>>, vector<16x32xf32>
    tpu.vector_store %arg14[%c0_49, %c0_50], %156 {strides = array<i32>} : memref<16x32xf32, #tpu.memory_space<vmem>>, vector<16x32xf32>,
    %c0_51 = arith.constant 0 : index
    %c0_52 = arith.constant 0 : index
    %c0_53 = arith.constant 0 : index
    %162 = vector.load %arg13[%c0_51, %c0_52, %c0_53] : memref<4x16x32xf32, #tpu.memory_space<vmem>>, vector<4x16x32xf32>
    %163 = vector.shape_cast %162 : vector<4x16x32xf32> to vector<64x32xf32>
    %164 = arith.truncf %163 : vector<64x32xf32> to vector<64x32xbf16>
    %c0_54 = arith.constant 0 : index
    %c0_55 = arith.constant 0 : index
    %165 = vector.load %arg8[%c0_54, %c0_55] : memref<32x32xbf16, #tpu.memory_space<vmem>>, vector<32x32xbf16>
    %cst_56 = arith.constant dense<0.000000e+00> : vector<64x32xf32>
    %166 = tpu.matmul %164, %165, %cst_56 {dimension_numbers = #tpu.dot_dimension_numbers<[1], [0], [0], [1], [0, 0, 1, 1], [], []>} : vector<64x32xbf16>, vector<32x32xbf16>, vector<64x32xf32> -> vector<64x32xf32>
    %c0_57 = arith.constant 0 : index
    %c0_58 = arith.constant 0 : index
    %167 = vector.load %arg9[%c0_57, %c0_58] : memref<1x32xf32, #tpu.memory_space<vmem>>, vector<1x32xf32>
    %168 = vector.broadcast %167 : vector<1x32xf32> to vector<64x32xf32>
    %169 = arith.addf %166, %168 : vector<64x32xf32>
    %170 = math.tanh %169 : vector<64x32xf32>
    %c0_59 = arith.constant 0 : index
    %c0_60 = arith.constant 0 : index
    %c0_61 = arith.constant 0 : index
    %171 = vector.load %arg13[%c0_59, %c0_60, %c0_61] : memref<4x16x32xf32, #tpu.memory_space<vmem>>, vector<4x16x32xf32>
    %c0_62 = arith.constant 0 : index
    %c0_63 = arith.constant 0 : index
    %c0_64 = arith.constant 0 : index
    %172 = vector.load %arg10[%c0_62, %c0_63, %c0_64] : memref<4x16x32xf32, #tpu.memory_space<vmem>>, vector<4x16x32xf32>
    tpu.vector_store %arg10[%c0_62, %c0_63, %c0_64], %171 {strides = array<i32>} : memref<4x16x32xf32, #tpu.memory_space<vmem>>, vector<4x16x32xf32>,
    %173 = vector.shape_cast %170 : vector<64x32xf32> to vector<4x16x32xf32>
    %c0_65 = arith.constant 0 : index
    %c0_66 = arith.constant 0 : index
    %c0_67 = arith.constant 0 : index
    %174 = vector.load %arg11[%c0_65, %c0_66, %c0_67] : memref<4x16x32xf32, #tpu.memory_space<vmem>>, vector<4x16x32xf32>
    tpu.vector_store %arg11[%c0_65, %c0_66, %c0_67], %173 {strides = array<i32>} : memref<4x16x32xf32, #tpu.memory_space<vmem>>, vector<4x16x32xf32>,
    return
  }
  func.func @transform_0(%arg0: i32, %arg1: i32) -> (i32, i32, i32) {
    %c0_i32 = arith.constant 0 : i32
    %c0_i32_0 = arith.constant 0 : i32
    return %arg1, %arg0, %c0_i32 : i32, i32, i32
  }
  func.func @transform_1(%arg0: i32, %arg1: i32) -> (i32, i32) {
    %c0_i32 = arith.constant 0 : i32
    %c0_i32_0 = arith.constant 0 : i32
    return %arg0, %c0_i32 : i32, i32
  }
  func.func @transform_2(%arg0: i32, %arg1: i32) -> (i32, i32) {
    %c0_i32 = arith.constant 0 : i32
    %c0_i32_0 = arith.constant 0 : i32
    %c0_i32_1 = arith.constant 0 : i32
    return %c0_i32, %c0_i32_0 : i32, i32
  }
  func.func @transform_3(%arg0: i32, %arg1: i32) -> (i32, i32) {
    %c0_i32 = arith.constant 0 : i32
    %c0_i32_0 = arith.constant 0 : i32
    %c0_i32_1 = arith.constant 0 : i32
    return %c0_i32, %c0_i32_0 : i32, i32
  }
  func.func @transform_4(%arg0: i32, %arg1: i32) -> (i32, i32) {
    %c0_i32 = arith.constant 0 : i32
    %c0_i32_0 = arith.constant 0 : i32
    %c0_i32_1 = arith.constant 0 : i32
    return %c0_i32, %c0_i32_0 : i32, i32
  }
  func.func @transform_5(%arg0: i32, %arg1: i32) -> (i32, i32) {
    %c0_i32 = arith.constant 0 : i32
    %c0_i32_0 = arith.constant 0 : i32
    %c0_i32_1 = arith.constant 0 : i32
    return %c0_i32, %c0_i32_0 : i32, i32
  }
  func.func @transform_6(%arg0: i32, %arg1: i32) -> (i32, i32) {
    %c0_i32 = arith.constant 0 : i32
    %c0_i32_0 = arith.constant 0 : i32
    %c0_i32_1 = arith.constant 0 : i32
    return %c0_i32, %c0_i32_0 : i32, i32
  }
  func.func @transform_7(%arg0: i32, %arg1: i32) -> (i32, i32) {
    %c0_i32 = arith.constant 0 : i32
    %c0_i32_0 = arith.constant 0 : i32
    %c0_i32_1 = arith.constant 0 : i32
    return %c0_i32, %c0_i32_0 : i32, i32
  }
  func.func @transform_8(%arg0: i32, %arg1: i32) -> (i32, i32, i32) {
    %c0_i32 = arith.constant 0 : i32
    %c0_i32_0 = arith.constant 0 : i32
    return %arg1, %arg0, %c0_i32 : i32, i32, i32
  }
  func.func @transform_9(%arg0: i32, %arg1: i32) -> (i32, i32, i32) {
    %c0_i32 = arith.constant 0 : i32
    %c0_i32_0 = arith.constant 0 : i32
    return %arg1, %arg0, %c0_i32 : i32, i32, i32
  }
}

</mosaic_0001>

<llo_original>
// kernel: tpu_custom_call.1
$region0: #{tpu_custom_call.1}
  #allocation0 [shape = 'u32[]', space=smem, size = 0x4, offset = 0x4, fixed_abs, tag = 'smem constant byte address 0x4 - core index']
  #allocation1 [shape = 'u32[72,128]{1,0:T(1,128)}', space=vmem, size = 0x9000, scoped, tag = 'internal scratch']
  #allocation2 [shape = 'f32[4,16,96]{2,1,0:T(8,128)}', space=vmem, size = 0x8000, scoped, tag = 'scratch operand']
  #allocation3 [shape = 'f32[4,16,32]{2,1,0:T(8,128)}', space=vmem, size = 0x8000, scoped, tag = 'scratch operand']
  #allocation4 [shape = 'f32[16,32]{1,0:T(8,128)}', space=vmem, size = 0x2000, scoped, tag = 'scratch operand']
  %s0 = inlined_call_operand.hbm [shape: bf16[8,16,32], index: 0, kind: input, shape index: {}]
  %s1 = inlined_call_operand.hbm [shape: f32[16,32], index: 1, kind: input, shape index: {}]
  %s2 = inlined_call_operand.hbm [shape: bf16[32,96], index: 2, kind: input, shape index: {}]
  %s3 = inlined_call_operand.vmem [shape: f32[1,96], index: 3, kind: input, shape index: {}]
  %s4 = inlined_call_operand.hbm [shape: bf16[32,96], index: 4, kind: input, shape index: {}]
  %s5 = inlined_call_operand.vmem [shape: f32[1,32], index: 5, kind: input, shape index: {}]
  %s6 = inlined_call_operand.hbm [shape: bf16[32,32], index: 6, kind: input, shape index: {}]
  %s7 = inlined_call_operand.vmem [shape: f32[1,32], index: 7, kind: input, shape index: {}]
  %s8 = inlined_call_operand.hbm [shape: f32[8,16,32], index: 8, kind: output, shape index: {0}]
  %s9 = inlined_call_operand.hbm [shape: f32[8,16,32], index: 9, kind: output, shape index: {1}]
  %10 = xla_tuple %s8, %s9
  %s11 = sld [smem:[#allocation0]]
  $region97: #{tpu_custom_call.1} parent=0
    _
  %s13 = ssub.s32 1, %s11
  %s14 = scalar_select 0, %s13, %s11
  $region1: #{tpu_custom_call.1} parent=0
    #allocation5 [shape = 'u8[32768]{0}', space=vmem, size = 0x8000, scoped, tag = 'input window, operand 0']
    #allocation6 [shape = 's32[2]{0}', space=sflag, size = 0x8, scoped, tag = 'scoped memory for tpu_custom_call.1']
    #allocation7 [shape = 's32[2]{0}', space=sflag, size = 0x8, scoped, tag = 'scoped memory for tpu_custom_call.1']
    #allocation8 [shape = 'u8[8192]{0}', space=vmem, size = 0x2000, scoped, tag = 'input window, operand 1, single buffered']
    #allocation9 [shape = 's32[1]{0}', space=sflag, size = 0x4, scoped, tag = 'scoped memory for tpu_custom_call.1']
    #allocation10 [shape = 'u8[8192]{0}', space=vmem, size = 0x2000, scoped, tag = 'input window, operand 2, single buffered']
    #allocation11 [shape = 'u8[8192]{0}', space=vmem, size = 0x2000, scoped, tag = 'input window, operand 4, single buffered']
    #allocation12 [shape = 's32[1]{0}', space=sflag, size = 0x4, scoped, tag = 'scoped memory for tpu_custom_call.1']
    #allocation13 [shape = 'u8[8192]{0}', space=vmem, size = 0x2000, scoped, tag = 'input window, operand 6, single buffered']
    #allocation14 [shape = 'u8[65536]{0}', space=vmem, size = 0x10000, scoped, tag = 'output window, operand 0']
    #allocation15 [shape = 'u8[65536]{0}', space=vmem, size = 0x10000, scoped, tag = 'output window, operand 1']
    #allocation16 [shape = 's32[2]{0}', space=sflag, size = 0x8, scoped, tag = 'scoped memory for tpu_custom_call.1']
    %15 = vsyncpa [#allocation6], 0
    %s16 = scalar_lea.sflag [#allocation6], 1
    %17 = vsyncpa %s16, 0
    %18 = vsyncpa [#allocation9], 0
    %19 = vsyncpa [#allocation12], 0
    %20 = vsyncpa [#allocation7], 0
    %s21 = scalar_lea.sflag [#allocation7], 1
    %22 = vsyncpa %s21, 0
    %23 = vsyncpa [#allocation16], 0
    %s24 = scalar_lea.sflag [#allocation16], 1
    %25 = vsyncpa %s24, 0
    loop: start=0, step=1, limit=4
    $region2: #{tpu_custom_call.1} parent=1 // loop_pre_header
      _
    $region3: #{tpu_custom_call.1} parent=1 // loop_header
      %s27 = sphi 0, %s31
      %p28 = scmp.ge.s32.totalorder %s27, 4
      %s34 = sphi 0, %s46
      %s35 = sphi 0, %s42
      %s36 = sphi 0, %s34
      %s37 = sphi 0, %s35
      %s38 = sphi 0, %s36
      %s39 = sphi 0, %s37
      %s51 = sphi 0, %s53
      %s54 = sphi 0, %s51
      %s55 = sphi 0, %s54
      %s71 = sphi 0, %s55
      %s77 = sphi 0, %s79
      %s80 = sphi 0, %s77
      %s81 = sphi 0, %s80
      %s97 = sphi 0, %s81
      %s101 = sphi 0, %s101
      %s103 = sphi 0, %s101
      %s104 = sphi 0, %s103
      %s118 = sphi 0, %s104
      %s122 = sphi 0, %s122
      %s124 = sphi 0, %s122
      %s125 = sphi 0, %s124
      %s139 = sphi 0, %s125
      %s143 = sphi 0, %s143
      %s145 = sphi 0, %s143
      %s146 = sphi 0, %s145
      %s160 = sphi 0, %s146
      %s164 = sphi 0, %s164
      %s166 = sphi 0, %s164
      %s167 = sphi 0, %s166
      %s181 = sphi 0, %s167
      %s185 = sphi 0, %s185
      %s187 = sphi 0, %s185
      %s188 = sphi 0, %s187
      %s202 = sphi 0, %s188
      %s206 = sphi 0, %s206
      %s208 = sphi 0, %s206
      %s209 = sphi 0, %s208
      %s223 = sphi 0, %s209
      %s231 = sphi 0, %s233
      %s234 = sphi 0, %s231
      %s235 = sphi 0, %s234
      %s251 = sphi 0, %s235
      %s259 = sphi 0, %s261
      %s262 = sphi 0, %s259
      %s263 = sphi 0, %s262
      %s279 = sphi 0, %s263
    $region4: #{tpu_custom_call.1} parent=1 // loop_header_branch
      %30 = sbr.rel (%p28) target = $region8
    $region5: #{tpu_custom_call.1} parent=1 // loop_body
      %s32 = ssub.s32 %s27, 1
      %s33 = ssub.s32 %s27, 2
      %s40 = sadd.s32 1, %s35
      %p41 = scmp.ge.s32.totalorder %s40, 2
      %s42 = scalar_select %p41, 0, %s40
      %s43 = sadd.s32 1, %s34
      %s44 = scalar_select %p41, %s43, %s34
      %p45 = scmp.ge.s32.totalorder %s44, 1
      %s46 = scalar_select %p45, 0, %s44
      %s47 = ssub.s32 %s35, %s42
      %s48 = ssub.s32 %s34, %s46
      %s49 = sor.u32 %s47, %s48
      %p50 = scmp.eq.s32.totalorder %s49, 0
      %s52 = sadd.s32 %s51, 1
      %s53 = scalar_select %p50, %s51, %s52
      %p56 = pneg %p50
      %p57 = scmp.eq.s32.totalorder %s27, 1
      %p58 = por %p56, %p57
      %p59 = scmp.ne.s32.totalorder %s51, %s54
      %p60 = scmp.eq.s32.totalorder %s27, 0
      %p61 = por %p59, %p60
      %p62 = scmp.ne.s32.totalorder %s51, %s54
      %p63 = scmp.eq.s32.totalorder %s32, 1
      %p64 = por %p62, %p63
      %p65 = scmp.ne.s32.totalorder %s54, %s55
      %p66 = scmp.eq.s32.totalorder %s32, 0
      %p67 = por %p65, %p66
      %p68 = scmp.ne.s32.totalorder %s54, %s55
      %p69 = scmp.eq.s32.totalorder %s33, 1
      %p70 = por %p68, %p69
      %p72 = scmp.ne.s32.totalorder %s55, %s71
      %p73 = scmp.eq.s32.totalorder %s33, 0
      %p74 = por %p72, %p73
      %s75 = ssub.s32 %s34, %s46
      %p76 = scmp.eq.s32.totalorder %s75, 0
      %s78 = sadd.s32 %s77, 1
      %s79 = scalar_select %p76, %s77, %s78
      %p82 = pneg %p76
      %p83 = scmp.eq.s32.totalorder %s27, 1
      %p84 = por %p82, %p83
      %p85 = scmp.ne.s32.totalorder %s77, %s80
      %p86 = scmp.eq.s32.totalorder %s27, 0
      %p87 = por %p85, %p86
      %p88 = scmp.ne.s32.totalorder %s77, %s80
      %p89 = scmp.eq.s32.totalorder %s32, 1
      %p90 = por %p88, %p89
      %p91 = scmp.ne.s32.totalorder %s80, %s81
      %p92 = scmp.eq.s32.totalorder %s32, 0
      %p93 = por %p91, %p92
      %p94 = scmp.ne.s32.totalorder %s80, %s81
      %p95 = scmp.eq.s32.totalorder %s33, 1
      %p96 = por %p94, %p95
      %p98 = scmp.ne.s32.totalorder %s81, %s97
      %p99 = scmp.eq.s32.totalorder %s33, 0
      %p100 = por %p98, %p99
      %s102 = sadd.s32 %s101, 1
      %p105 = scmp.eq.s32.totalorder %s27, 1
      %p106 = scmp.ne.s32.totalorder %s101, %s103
      %p107 = scmp.eq.s32.totalorder %s27, 0
      %p108 = por %p106, %p107
      %p109 = scmp.ne.s32.totalorder %s101, %s103
      %p110 = scmp.eq.s32.totalorder %s32, 1
      %p111 = por %p109, %p110
      %p112 = scmp.ne.s32.totalorder %s103, %s104
      %p113 = scmp.eq.s32.totalorder %s32, 0
      %p114 = por %p112, %p113
      %p115 = scmp.ne.s32.totalorder %s103, %s104
      %p116 = scmp.eq.s32.totalorder %s33, 1
      %p117 = por %p115, %p116
      %p119 = scmp.ne.s32.totalorder %s104, %s118
      %p120 = scmp.eq.s32.totalorder %s33, 0
      %p121 = por %p119, %p120
      %s123 = sadd.s32 %s122, 1
      %p126 = scmp.eq.s32.totalorder %s27, 1
      %p127 = scmp.ne.s32.totalorder %s122, %s124
      %p128 = scmp.eq.s32.totalorder %s27, 0
      %p129 = por %p127, %p128
      %p130 = scmp.ne.s32.totalorder %s122, %s124
      %p131 = scmp.eq.s32.totalorder %s32, 1
      %p132 = por %p130, %p131
      %p133 = scmp.ne.s32.totalorder %s124, %s125
      %p134 = scmp.eq.s32.totalorder %s32, 0
      %p135 = por %p133, %p134
      %p136 = scmp.ne.s32.totalorder %s124, %s125
      %p137 = scmp.eq.s32.totalorder %s33, 1
      %p138 = por %p136, %p137
      %p140 = scmp.ne.s32.totalorder %s125, %s139
      %p141 = scmp.eq.s32.totalorder %s33, 0
      %p142 = por %p140, %p141
      %s144 = sadd.s32 %s143, 1
      %p147 = scmp.eq.s32.totalorder %s27, 1
      %p148 = scmp.ne.s32.totalorder %s143, %s145
      %p149 = scmp.eq.s32.totalorder %s27, 0
      %p150 = por %p148, %p149
      %p151 = scmp.ne.s32.totalorder %s143, %s145
      %p152 = scmp.eq.s32.totalorder %s32, 1
      %p153 = por %p151, %p152
      %p154 = scmp.ne.s32.totalorder %s145, %s146
      %p155 = scmp.eq.s32.totalorder %s32, 0
      %p156 = por %p154, %p155
      %p157 = scmp.ne.s32.totalorder %s145, %s146
      %p158 = scmp.eq.s32.totalorder %s33, 1
      %p159 = por %p157, %p158
      %p161 = scmp.ne.s32.totalorder %s146, %s160
      %p162 = scmp.eq.s32.totalorder %s33, 0
      %p163 = por %p161, %p162
      %s165 = sadd.s32 %s164, 1
      %p168 = scmp.eq.s32.totalorder %s27, 1
      %p169 = scmp.ne.s32.totalorder %s164, %s166
      %p170 = scmp.eq.s32.totalorder %s27, 0
      %p171 = por %p169, %p170
      %p172 = scmp.ne.s32.totalorder %s164, %s166
      %p173 = scmp.eq.s32.totalorder %s32, 1
      %p174 = por %p172, %p173
      %p175 = scmp.ne.s32.totalorder %s166, %s167
      %p176 = scmp.eq.s32.totalorder %s32, 0
      %p177 = por %p175, %p176
      %p178 = scmp.ne.s32.totalorder %s166, %s167
      %p179 = scmp.eq.s32.totalorder %s33, 1
      %p180 = por %p178, %p179
      %p182 = scmp.ne.s32.totalorder %s167, %s181
      %p183 = scmp.eq.s32.totalorder %s33, 0
      %p184 = por %p182, %p183
      %s186 = sadd.s32 %s185, 1
      %p189 = scmp.eq.s32.totalorder %s27, 1
      %p190 = scmp.ne.s32.totalorder %s185, %s187
      %p191 = scmp.eq.s32.totalorder %s27, 0
      %p192 = por %p190, %p191
      %p193 = scmp.ne.s32.totalorder %s185, %s187
      %p194 = scmp.eq.s32.totalorder %s32, 1
      %p195 = por %p193, %p194
      %p196 = scmp.ne.s32.totalorder %s187, %s188
      %p197 = scmp.eq.s32.totalorder %s32, 0
      %p198 = por %p196, %p197
      %p199 = scmp.ne.s32.totalorder %s187, %s188
      %p200 = scmp.eq.s32.totalorder %s33, 1
      %p201 = por %p199, %p200
      %p203 = scmp.ne.s32.totalorder %s188, %s202
      %p204 = scmp.eq.s32.totalorder %s33, 0
      %p205 = por %p203, %p204
      %s207 = sadd.s32 %s206, 1
      %p210 = scmp.eq.s32.totalorder %s27, 1
      %p211 = scmp.ne.s32.totalorder %s206, %s208
      %p212 = scmp.eq.s32.totalorder %s27, 0
      %p213 = por %p211, %p212
      %p214 = scmp.ne.s32.totalorder %s206, %s208
      %p215 = scmp.eq.s32.totalorder %s32, 1
      %p216 = por %p214, %p215
      %p217 = scmp.ne.s32.totalorder %s208, %s209
      %p218 = scmp.eq.s32.totalorder %s32, 0
      %p219 = por %p217, %p218
      %p220 = scmp.ne.s32.totalorder %s208, %s209
      %p221 = scmp.eq.s32.totalorder %s33, 1
      %p222 = por %p220, %p221
      %p224 = scmp.ne.s32.totalorder %s209, %s223
      %p225 = scmp.eq.s32.totalorder %s33, 0
      %p226 = por %p224, %p225
      %s227 = ssub.s32 %s35, %s42
      %s228 = ssub.s32 %s34, %s46
      %s229 = sor.u32 %s227, %s228
      %p230 = scmp.eq.s32.totalorder %s229, 0
      %s232 = sadd.s32 %s231, 1
      %s233 = scalar_select %p230, %s231, %s232
      %p236 = pneg %p230
      %p237 = scmp.eq.s32.totalorder %s27, 1
      %p238 = por %p236, %p237
      %p239 = scmp.ne.s32.totalorder %s231, %s234
      %p240 = scmp.eq.s32.totalorder %s27, 0
      %p241 = por %p239, %p240
      %p242 = scmp.ne.s32.totalorder %s231, %s234
      %p243 = scmp.eq.s32.totalorder %s32, 1
      %p244 = por %p242, %p243
      %p245 = scmp.ne.s32.totalorder %s234, %s235
      %p246 = scmp.eq.s32.totalorder %s32, 0
      %p247 = por %p245, %p246
      %p248 = scmp.ne.s32.totalorder %s234, %s235
      %p249 = scmp.eq.s32.totalorder %s33, 1
      %p250 = por %p248, %p249
      %p252 = scmp.ne.s32.totalorder %s235, %s251
      %p253 = scmp.eq.s32.totalorder %s33, 0
      %p254 = por %p252, %p253
      %s255 = ssub.s32 %s35, %s42
      %s256 = ssub.s32 %s34, %s46
      %s257 = sor.u32 %s255, %s256
      %p258 = scmp.eq.s32.totalorder %s257, 0
      %s260 = sadd.s32 %s259, 1
      %s261 = scalar_select %p258, %s259, %s260
      %p264 = pneg %p258
      %p265 = scmp.eq.s32.totalorder %s27, 1
      %p266 = por %p264, %p265
      %p267 = scmp.ne.s32.totalorder %s259, %s262
      %p268 = scmp.eq.s32.totalorder %s27, 0
      %p269 = por %p267, %p268
      %p270 = scmp.ne.s32.totalorder %s259, %s262
      %p271 = scmp.eq.s32.totalorder %s32, 1
      %p272 = por %p270, %p271
      %p273 = scmp.ne.s32.totalorder %s262, %s263
      %p274 = scmp.eq.s32.totalorder %s32, 0
      %p275 = por %p273, %p274
      %p276 = scmp.ne.s32.totalorder %s262, %s263
      %p277 = scmp.eq.s32.totalorder %s33, 1
      %p278 = por %p276, %p277
      %p280 = scmp.ne.s32.totalorder %s263, %s279
      %p281 = scmp.eq.s32.totalorder %s33, 0
      %p282 = por %p280, %p281
      %p283 = scmp.le.s32.totalorder 1, %s27
      %p284 = scmp.lt.s32.totalorder %s27, 3
      %p285 = pnand %p283, %p284
      %p286 = pneg %p285
      // Predicated region
      $region9: #{tpu_custom_call.1} parent=5 // pred_check
        _
      $region10: #{tpu_custom_call.1} parent=5 // pred_check_branch
        %288 = sbr.rel (%p285) target = $region12
      $region11: #{tpu_custom_call.1} parent=5 // pred_region
        %s289 = ssub.s32 %s27, 1
        // Predicated region
        $region13: #{tpu_custom_call.1} parent=11 // pred_check
          %p290 = pneg %p93
        $region14: #{tpu_custom_call.1} parent=11 // pred_check_branch
          %292 = sbr.rel (%p290) target = $region16
        $region15: #{tpu_custom_call.1} parent=11 // pred_region
          %s293 = smul.u32 2, %s36
          %295 = vsyncadd [#allocation9], 0
          %s296 = smul.addr %s293, 8
          %s297 = scalar_lea.hbm %s1, %s296
          %s298 = sshll.u32 %s297, 4
          %s299 = int_to_ptr.hbm [resolvable:$true] %s298
          %s300 = sshll.u32 [#allocation8], 4
          %s301 = int_to_ptr.vmem [resolvable:$true] %s300
          %306 = dma.hbm_to_vmem [thread:$0]  %s299, 256, %s301, [#allocation9], 128, 128, 8
        $region16: #{tpu_custom_call.1} parent=11 // pred_fallthru
          _
        // Predicated region
        $region17: #{tpu_custom_call.1} parent=11 // pred_check
          %p307 = pneg %p114
        $region18: #{tpu_custom_call.1} parent=11 // pred_check_branch
          %309 = sbr.rel (%p307) target = $region20
        $region19: #{tpu_custom_call.1} parent=11 // pred_region
          %311 = vsyncadd [#allocation9], 0
          %s312 = sshll.u32 %s2, 4
          %s313 = int_to_ptr.hbm [resolvable:$true] %s312
          %s314 = sshll.u32 [#allocation10], 4
          %s315 = int_to_ptr.vmem [resolvable:$true] %s314
          %320 = dma.hbm_to_vmem [thread:$0]  %s313, 256, %s315, [#allocation9], 64, 64, 4
        $region20: #{tpu_custom_call.1} parent=11 // pred_fallthru
          _
        // Predicated region
        $region21: #{tpu_custom_call.1} parent=11 // pred_check
          %p321 = pneg %p135
        $region22: #{tpu_custom_call.1} parent=11 // pred_check_branch
          %323 = sbr.rel (%p321) target = $region24
        $region23: #{tpu_custom_call.1} parent=11 // pred_region
          _
        $region24: #{tpu_custom_call.1} parent=11 // pred_fallthru
          _
        // Predicated region
        $region25: #{tpu_custom_call.1} parent=11 // pred_check
          %p324 = pneg %p156
        $region26: #{tpu_custom_call.1} parent=11 // pred_check_branch
          %326 = sbr.rel (%p324) target = $region28
        $region27: #{tpu_custom_call.1} parent=11 // pred_region
          %328 = vsyncadd [#allocation12], 0
          %s329 = sshll.u32 %s4, 4
          %s330 = int_to_ptr.hbm [resolvable:$true] %s329
          %s331 = sshll.u32 [#allocation11], 4
          %s332 = int_to_ptr.vmem [resolvable:$true] %s331
          %337 = dma.hbm_to_vmem [thread:$0]  %s330, 256, %s332, [#allocation12], 64, 64, 4
        $region28: #{tpu_custom_call.1} parent=11 // pred_fallthru
          _
        // Predicated region
        $region29: #{tpu_custom_call.1} parent=11 // pred_check
          %p338 = pneg %p177
        $region30: #{tpu_custom_call.1} parent=11 // pred_check_branch
          %340 = sbr.rel (%p338) target = $region32
        $region31: #{tpu_custom_call.1} parent=11 // pred_region
          _
        $region32: #{tpu_custom_call.1} parent=11 // pred_fallthru
          _
        // Predicated region
        $region33: #{tpu_custom_call.1} parent=11 // pred_check
          %p341 = pneg %p198
        $region34: #{tpu_custom_call.1} parent=11 // pred_check_branch
          %343 = sbr.rel (%p341) target = $region36
        $region35: #{tpu_custom_call.1} parent=11 // pred_region
          %345 = vsyncadd [#allocation12], 0
          %s346 = sshll.u32 %s6, 4
          %s347 = int_to_ptr.hbm [resolvable:$true] %s346
          %s348 = sshll.u32 [#allocation13], 4
          %s349 = int_to_ptr.vmem [resolvable:$true] %s348
          %354 = dma.hbm_to_vmem [thread:$0]  %s347, 256, %s349, [#allocation12], 64, 64, 4
        $region36: #{tpu_custom_call.1} parent=11 // pred_fallthru
          _
        // Predicated region
        $region37: #{tpu_custom_call.1} parent=11 // pred_check
          %p355 = pneg %p219
        $region38: #{tpu_custom_call.1} parent=11 // pred_check_branch
          %357 = sbr.rel (%p355) target = $region40
        $region39: #{tpu_custom_call.1} parent=11 // pred_region
          _
        $region40: #{tpu_custom_call.1} parent=11 // pred_fallthru
          _
      $region12: #{tpu_custom_call.1} parent=5 // pred_fallthru
        _
      %p358 = scmp.lt.s32.totalorder %s27, 2
      // Predicated region
      $region41: #{tpu_custom_call.1} parent=5 // pred_check
        %p359 = pneg %p358
      $region42: #{tpu_custom_call.1} parent=5 // pred_check_branch
        %361 = sbr.rel (%p359) target = $region44
      $region43: #{tpu_custom_call.1} parent=5 // pred_region
        // Predicated region
        $region45: #{tpu_custom_call.1} parent=43 // pred_check
          %p362 = pneg %p61
        $region46: #{tpu_custom_call.1} parent=43 // pred_check_branch
          %364 = sbr.rel (%p362) target = $region48
        $region47: #{tpu_custom_call.1} parent=43 // pred_region
          %s365 = sand.u32 %s51, 1
          %s366 = scalar_lea.sflag [#allocation6], %s365
          %s367 = sand.u32 %s51, 1
          %s368 = smul.addr %s367, 32
          %s369 = scalar_lea.vmem [#allocation5], %s368
          %s370 = smul.u32 4, %s35
          %s371 = smul.u32 2, %s34
          %373 = vsyncadd %s366, 0
          %s374 = smul.addr %s370, 2
          %s375 = sadd.s32 %s371, %s374
          %s376 = smul.addr %s375, 4
          %s377 = scalar_lea.hbm %s0, %s376
          %s378 = sshll.u32 %s377, 4
          %s379 = int_to_ptr.hbm [resolvable:$true] %s378
          %s380 = sshll.u32 %s369, 4
          %s381 = int_to_ptr.vmem [resolvable:$true] %s380
          %386 = dma.hbm_to_vmem [thread:$0]  %s379, 512, %s381, %s366, 64, 64, 4
        $region48: #{tpu_custom_call.1} parent=43 // pred_fallthru
          _
      $region44: #{tpu_custom_call.1} parent=5 // pred_fallthru
        _
      %p387 = scmp.le.s32.totalorder 1, %s27
      %p388 = scmp.lt.s32.totalorder %s27, 3
      %p389 = pnand %p387, %p388
      %p390 = pneg %p389
      // Predicated region
      $region49: #{tpu_custom_call.1} parent=5 // pred_check
        _
      $region50: #{tpu_custom_call.1} parent=5 // pred_check_branch
        %392 = sbr.rel (%p389) target = $region52
      $region51: #{tpu_custom_call.1} parent=5 // pred_region
        %s393 = ssub.s32 %s27, 1
        %s394 = sand.u32 %s54, 1
        %s395 = scalar_lea.sflag [#allocation6], %s394
        %s396 = sand.u32 %s54, 1
        %s397 = smul.addr %s396, 32
        %s398 = scalar_lea.vmem [#allocation5], %s397
        // Predicated region
        $region53: #{tpu_custom_call.1} parent=51 // pred_check
          %p399 = pneg %p67
        $region54: #{tpu_custom_call.1} parent=51 // pred_check_branch
          %401 = sbr.rel (%p399) target = $region56
        $region55: #{tpu_custom_call.1} parent=51 // pred_region
          %403 = dma.done %s395, 512
        $region56: #{tpu_custom_call.1} parent=51 // pred_fallthru
          _
        // Predicated region
        $region57: #{tpu_custom_call.1} parent=51 // pred_check
          %p404 = pneg %p93
        $region58: #{tpu_custom_call.1} parent=51 // pred_check_branch
          %406 = sbr.rel (%p404) target = $region60
        $region59: #{tpu_custom_call.1} parent=51 // pred_region
          %408 = dma.done [#allocation9], 256
        $region60: #{tpu_custom_call.1} parent=51 // pred_fallthru
          _
        // Predicated region
        $region61: #{tpu_custom_call.1} parent=51 // pred_check
          %p409 = pneg %p114
        $region62: #{tpu_custom_call.1} parent=51 // pred_check_branch
          %411 = sbr.rel (%p409) target = $region64
        $region63: #{tpu_custom_call.1} parent=51 // pred_region
          %413 = dma.done [#allocation9], 256
        $region64: #{tpu_custom_call.1} parent=51 // pred_fallthru
          _
        // Predicated region
        $region65: #{tpu_custom_call.1} parent=51 // pred_check
          %p414 = pneg %p156
        $region66: #{tpu_custom_call.1} parent=51 // pred_check_branch
          %416 = sbr.rel (%p414) target = $region68
        $region67: #{tpu_custom_call.1} parent=51 // pred_region
          %418 = dma.done [#allocation12], 256
        $region68: #{tpu_custom_call.1} parent=51 // pred_fallthru
          _
        // Predicated region
        $region69: #{tpu_custom_call.1} parent=51 // pred_check
          %p419 = pneg %p198
        $region70: #{tpu_custom_call.1} parent=51 // pred_check_branch
          %421 = sbr.rel (%p419) target = $region72
        $region71: #{tpu_custom_call.1} parent=51 // pred_region
          %423 = dma.done [#allocation12], 256
        $region72: #{tpu_custom_call.1} parent=51 // pred_fallthru
          _
        %s424 = sand.u32 %s54, 1
        %s425 = scalar_lea.sflag [#allocation6], %s424
        %s426 = sand.u32 %s54, 1
        %s427 = smul.addr %s426, 32
        %s428 = scalar_lea.vmem [#allocation5], %s427
        %p429 = pneg %p67
        %p430 = pneg %p64
        %p431 = pneg %p93
        %p432 = pneg %p90
        %p433 = pneg %p114
        %p434 = pneg %p111
        %p435 = pneg %p135
        %p436 = pneg %p132
        %p437 = pneg %p156
        %p438 = pneg %p153
        %p439 = pneg %p177
        %p440 = pneg %p174
        %p441 = pneg %p198
        %p442 = pneg %p195
        %p443 = pneg %p219
        %p444 = pneg %p216
        %p445 = pneg %p247
        %p446 = pneg %p244
        %s447 = sand.u32 %s234, 1
        %s448 = scalar_lea.sflag [#allocation7], %s447
        %s449 = sand.u32 %s234, 1
        %s450 = smul.addr %s449, 64
        %s451 = scalar_lea.vmem [#allocation14], %s450
        %p452 = pneg %p275
        %p453 = pneg %p272
        %s454 = sand.u32 %s262, 1
        %s455 = scalar_lea.sflag [#allocation16], %s454
        %s456 = sand.u32 %s262, 1
        %s457 = smul.addr %s456, 64
        %s458 = scalar_lea.vmem [#allocation15], %s457
        %s459 = smul.u32 4, %s37
        %s460 = smul.u32 2, %s36
        %s461 = smul.u32 2, %s36
        %s462 = smul.u32 4, %s37
        %s463 = smul.u32 2, %s36
        %s464 = smul.u32 4, %s37
        %s465 = smul.u32 2, %s36
        %p467 = scmp.eq.s32.totalorder %s37, 0
        // Predicated region
        $region73: #{tpu_custom_call.1} parent=51 // pred_check
          %p468 = pneg %p467
        $region74: #{tpu_custom_call.1} parent=51 // pred_check_branch
          %470 = sbr.rel (%p468) target = $region76
        $region75: #{tpu_custom_call.1} parent=51 // pred_region
          %v471 = vld [vmem:[#allocation8] sm:$0xff]
          %v472 = vld [vmem:[#allocation8 + $0x8] sm:$0xff]
          %vm473 = vcmask 261120
          %474 = vst.msk [vmem:[#allocation4] sm:$0xff] %vm473, %v471
          %475 = vst.msk [vmem:[#allocation4 + $0x8] sm:$0xff] %vm473, %v472
        $region76: #{tpu_custom_call.1} parent=51 // pred_fallthru
          _
        %v476 = vld [vmem:[%s398] sm:$0xf]
        %v477 = vld [vmem:[%s398 + $0x4] sm:$0xf]
        %v478 = vld [vmem:[%s398 + $0x8] sm:$0xf]
        %v479 = vld [vmem:[%s398 + $0xc] sm:$0xf]
        %v480 = vld [vmem:[%s398 + $0x10] sm:$0xf]
        %v481 = vld [vmem:[%s398 + $0x14] sm:$0xf]
        %v482 = vld [vmem:[%s398 + $0x18] sm:$0xf]
        %v483 = vld [vmem:[%s398 + $0x1c] sm:$0xf]
        %v484 = vld [vmem:[#allocation10] sm:$0xf]
        %v485 = vld [vmem:[#allocation10 + $0x4] sm:$0xf]
        %v486 = vld [vmem:[#allocation10 + $0x8] sm:$0xf]
        %v487 = vld [vmem:[#allocation10 + $0xc] sm:$0xf]
        %v488 = vld [vmem:[%s3] sm:$0x1]
        %v490 = vperm.slane %v488, 0
        %v500 = vunpack.c.l.b16 %v476
        %v501 = vunpack.c.l.b16 %v477
        %v502 = vunpack.c.l.b16 %v478
        %v503 = vunpack.c.l.b16 %v479
        %v504 = vunpack.c.l.b16 %v480
        %v505 = vunpack.c.l.b16 %v481
        %v506 = vunpack.c.l.b16 %v482
        %v507 = vunpack.c.l.b16 %v483
        %v508 = vpack.c.b16 %v501, %v500
        %v509 = vpack.c.b16 %v503, %v502
        %v510 = vpack.c.b16 %v505, %v504
        %v511 = vpack.c.b16 %v507, %v506
        %v516 = vunpack.c.l.b16 %v484
        %v517 = vunpack.c.l.b16 %v485
        %v518 = vunpack.c.l.b16 %v486
        %v519 = vunpack.c.l.b16 %v487
        %v520 = vpack.c.b16 %v517, %v516
        %v521 = vpack.c.b16 %v519, %v518
        %vm524 = vcmask 261120
        %v526 = vsel %vm524, %v508, 0
        %v529 = vsel %vm524, %v509, 0
        %v532 = vsel %vm524, %v510, 0
        %v535 = vsel %vm524, %v511, 0
        %537 = vmatpush.bf16.msra.mxu0 0
        %538 = vmatpush.bf16.msra.mxu0 0
        %539 = vmatpush.bf16.msra.mxu0 0
        %540 = vmatpush.bf16.msra.mxu0 0
        %541 = vmatpush.bf16.msra.mxu0 0
        %542 = vmatpush.bf16.msra.mxu0 0
        %543 = vmatpush.bf16.msra.mxu0 %v521
        %544 = vmatpush.bf16.msra.mxu0 %v520
        %545 = vmatmul.bf16.gmra.mxu0 %v526
        %v546 = vpop.f32.mrf.mxu0
        %v547 = vadd.f32 %v490, %v546
        %v548 = vpop.f32.mrf.mxu0
        %v549 = vadd.f32 %v490, %v548
        %550 = vmatmul.bf16.gmra.mxu0 %v529
        %v551 = vpop.f32.mrf.mxu0
        %v552 = vadd.f32 %v490, %v551
        %v553 = vpop.f32.mrf.mxu0
        %v554 = vadd.f32 %v490, %v553
        %555 = vmatmul.bf16.gmra.mxu0 %v532
        %v556 = vpop.f32.mrf.mxu0
        %v557 = vadd.f32 %v490, %v556
        %v558 = vpop.f32.mrf.mxu0
        %v559 = vadd.f32 %v490, %v558
        %560 = vmatmul.bf16.gmra.mxu0 %v535
        %v561 = vpop.f32.mrf.mxu0
        %v562 = vadd.f32 %v490, %v561
        %v563 = vpop.f32.mrf.mxu0
        %v564 = vadd.f32 %v490, %v563
        %565 = vdwg.mxu0
        %vm566 = vcmask 785408
        %567 = vst.msk [vmem:[#allocation2] sm:$0xff] %vm566, %v547
        %568 = vst.msk [vmem:[#allocation2 + $0x8] sm:$0xff] %vm566, %v549
        %569 = vst.msk [vmem:[#allocation2 + $0x10] sm:$0xff] %vm566, %v552
        %570 = vst.msk [vmem:[#allocation2 + $0x18] sm:$0xff] %vm566, %v554
        %571 = vst.msk [vmem:[#allocation2 + $0x20] sm:$0xff] %vm566, %v557
        %572 = vst.msk [vmem:[#allocation2 + $0x28] sm:$0xff] %vm566, %v559
        %573 = vst.msk [vmem:[#allocation2 + $0x30] sm:$0xff] %vm566, %v562
        %574 = vst.msk [vmem:[#allocation2 + $0x38] sm:$0xff] %vm566, %v564
        %v575 = vld [vmem:[#allocation11] sm:$0xf]
        %v576 = vld [vmem:[#allocation11 + $0x4] sm:$0xf]
        %v577 = vld [vmem:[#allocation11 + $0x8] sm:$0xf]
        %v578 = vld [vmem:[#allocation11 + $0xc] sm:$0xf]
        %v579 = vld [vmem:[%s5] sm:$0x1]
        %v581 = vperm.slane %v579, 0
        %v582 = vld [vmem:[#allocation4] sm:$0xff]
        %v583 = vld [vmem:[#allocation4 + $0x8] sm:$0xff]
        %v584 = vld [vmem:[#allocation2] sm:$0xff]
        %v585 = vld [vmem:[#allocation2 + $0x8] sm:$0xff]
        %v586 = vpack.c.bf16 %v583, %v582
        %v591 = vunpack.c.l.b16 %v575
        %v592 = vunpack.c.l.b16 %v576
        %v593 = vunpack.c.l.b16 %v577
        %v594 = vunpack.c.l.b16 %v578
        %v595 = vpack.c.b16 %v592, %v591
        %v596 = vpack.c.b16 %v594, %v593
        %v600 = vsel %vm524, %v586, 0
        %602 = vmatpush.bf16.msra.mxu0 0
        %603 = vmatpush.bf16.msra.mxu0 0
        %604 = vmatpush.bf16.msra.mxu0 0
        %605 = vmatpush.bf16.msra.mxu0 0
        %606 = vmatpush.bf16.msra.mxu0 0
        %607 = vmatpush.bf16.msra.mxu0 0
        %608 = vmatpush.bf16.msra.mxu0 %v596
        %609 = vmatpush.bf16.msra.mxu0 %v595
        %610 = vmatmul.bf16.gmra.mxu0 %v600
        %v611 = vpop.f32.mrf.mxu0
        %v612 = vadd.f32 0.0, %v611
        %v613 = vpop.f32.mrf.mxu0
        %v614 = vadd.f32 0.0, %v613
        %615 = vdwg.mxu0
        %v616 = vadd.f32 %v584, %v612
        %v617 = vadd.f32 %v585, %v614
        %v618 = vxor.u32 %v616, 2147483648
        %v619 = vxor.u32 %v617, 2147483648
        %v620 = vmul.f32 %v618, 1.442695
        %v621 = vpow.pop %v620
        %v622 = vmul.f32 %v619, 1.442695
        %v623 = vpow.pop %v622
        %v624 = vadd.f32 %v621, 1.0
        %v625 = vadd.f32 %v623, 1.0
        %v626 = vrcp.pop %v624
        %v627 = vmul.f32 %v624, %v626
        %v628 = vsub.f32 1.0, %v627
        %v629 = vmul.f32 %v626, %v628
        %v630 = vadd.f32 %v626, %v629
        %vm631 = vweird.f32 %v624
        %vm632 = vweird.f32 %v626
        %vm633 = vmor %vm631, %vm632
        %v634 = vsel %vm633, %v626, %v630
        %v635 = vand.u32 2147483647, %v624
        %vm636 = vcmp.eq.f32.partialorder %v635, 8.507059e+37
        %v637 = vand.u32 %v624, 2147483648
        %v638 = vor.u32 1.1754944e-38, %v637
        %v639 = vsel %vm636, %v638, %v634
        %v640 = vmul.f32 1.0, %v639
        %v641 = vrcp.pop %v625
        %v642 = vmul.f32 %v625, %v641
        %v643 = vsub.f32 1.0, %v642
        %v644 = vmul.f32 %v641, %v643
        %v645 = vadd.f32 %v641, %v644
        %vm646 = vweird.f32 %v625
        %vm647 = vweird.f32 %v641
        %vm648 = vmor %vm646, %vm647
        %v649 = vsel %vm648, %v641, %v645
        %v650 = vand.u32 2147483647, %v625
        %vm651 = vcmp.eq.f32.partialorder %v650, 8.507059e+37
        %v652 = vand.u32 %v625, 2147483648
        %v653 = vor.u32 1.1754944e-38, %v652
        %v654 = vsel %vm651, %v653, %v649
        %v655 = vmul.f32 1.0, %v654
        %656 = vrot.lane.b32.xlu0 %v581, 64
        %v657 = vpop.permute.xlu0 %656
        %v659 = vadd.f32 %v612, %v657
        %v660 = vadd.f32 %v614, %v657
        %663 = vrot.lane.b32.xlu0 %v659, 64
        %v664 = vpop.permute.xlu0 %663
        %665 = vrot.lane.b32.xlu0 %v660, 64
        %v666 = vpop.permute.xlu0 %665
        %v669 = vmul.f32 %v640, %v664
        %v670 = vmul.f32 %v655, %v666
        %673 = vrot.lane.b32.xlu0 %v669, 64
        %v674 = vpop.permute.xlu0 %673
        %675 = vrot.lane.b32.xlu0 %v670, 64
        %v676 = vpop.permute.xlu0 %675
        %v679 = vadd.f32 %v584, %v674
        %v680 = vadd.f32 %v585, %v676
        %v681 = vtanh.pop %v679
        %v682 = vtanh.pop %v680
        %v683 = vsub.f32 1.0, %v640
        %v684 = vsub.f32 1.0, %v655
        %687 = vrot.lane.b32.xlu0 %v681, 96
        %v688 = vpop.permute.xlu0 %687
        %689 = vrot.lane.b32.xlu0 %v682, 96
        %v690 = vpop.permute.xlu0 %689
        %v693 = vmul.f32 %v683, %v688
        %v694 = vmul.f32 %v684, %v690
        %697 = vrot.lane.b32.xlu0 %v582, 32
        %v698 = vpop.permute.xlu0 %697
        %699 = vrot.lane.b32.xlu0 %v583, 32
        %v700 = vpop.permute.xlu0 %699
        %v703 = vmul.f32 %v640, %v698
        %v704 = vmul.f32 %v655, %v700
        %v705 = vadd.f32 %v693, %v703
        %v706 = vadd.f32 %v694, %v704
        %709 = vrot.lane.b32.xlu0 %v705, 96
        %v710 = vpop.permute.xlu0 %709
        %711 = vrot.lane.b32.xlu0 %v706, 96
        %v712 = vpop.permute.xlu0 %711
        %715 = vst.msk [vmem:[#allocation3] sm:$0xff] %vm524, %v710
        %716 = vst.msk [vmem:[#allocation3 + $0x8] sm:$0xff] %vm524, %v712
        %s717 = scalar_lea.vmem [#allocation2], 16
        %v718 = vld [vmem:[%s717] sm:$0xff]
        %v719 = vld [vmem:[%s717 + $0x8] sm:$0xff]
        %v720 = vpack.c.bf16 %v706, %v705
        %722 = vrot.lane.b32.xlu0 %v720, 96
        %v723 = vpop.permute.xlu0 %722
        %v725 = vsel %vm524, %v723, 0
        %727 = vmatpush.bf16.msra.mxu0 0
        %728 = vmatpush.bf16.msra.mxu0 0
        %729 = vmatpush.bf16.msra.mxu0 0
        %730 = vmatpush.bf16.msra.mxu0 0
        %731 = vmatpush.bf16.msra.mxu0 0
        %732 = vmatpush.bf16.msra.mxu0 0
        %733 = vmatpush.bf16.msra.mxu0 %v596
        %734 = vmatpush.bf16.msra.mxu0 %v595
        %735 = vmatmul.bf16.gmra.mxu0 %v725
        %v736 = vpop.f32.mrf.mxu0
        %v737 = vadd.f32 0.0, %v736
        %v738 = vpop.f32.mrf.mxu0
        %v739 = vadd.f32 0.0, %v738
        %740 = vdwg.mxu0
        %v741 = vadd.f32 %v718, %v737
        %v742 = vadd.f32 %v719, %v739
        %v743 = vxor.u32 %v741, 2147483648
        %v744 = vxor.u32 %v742, 2147483648
        %v745 = vmul.f32 %v743, 1.442695
        %v746 = vpow.pop %v745
        %v747 = vmul.f32 %v744, 1.442695
        %v748 = vpow.pop %v747
        %v749 = vadd.f32 %v746, 1.0
        %v750 = vadd.f32 %v748, 1.0
        %v751 = vrcp.pop %v749
        %v752 = vmul.f32 %v749, %v751
        %v753 = vsub.f32 1.0, %v752
        %v754 = vmul.f32 %v751, %v753
        %v755 = vadd.f32 %v751, %v754
        %vm756 = vweird.f32 %v749
        %vm757 = vweird.f32 %v751
        %vm758 = vmor %vm756, %vm757
        %v759 = vsel %vm758, %v751, %v755
        %v760 = vand.u32 2147483647, %v749
        %vm761 = vcmp.eq.f32.partialorder %v760, 8.507059e+37
        %v762 = vand.u32 %v749, 2147483648
        %v763 = vor.u32 1.1754944e-38, %v762
        %v764 = vsel %vm761, %v763, %v759
        %v765 = vmul.f32 1.0, %v764
        %v766 = vrcp.pop %v750
        %v767 = vmul.f32 %v750, %v766
        %v768 = vsub.f32 1.0, %v767
        %v769 = vmul.f32 %v766, %v768
        %v770 = vadd.f32 %v766, %v769
        %vm771 = vweird.f32 %v750
        %vm772 = vweird.f32 %v766
        %vm773 = vmor %vm771, %vm772
        %v774 = vsel %vm773, %v766, %v770
        %v775 = vand.u32 2147483647, %v750
        %vm776 = vcmp.eq.f32.partialorder %v775, 8.507059e+37
        %v777 = vand.u32 %v750, 2147483648
        %v778 = vor.u32 1.1754944e-38, %v777
        %v779 = vsel %vm776, %v778, %v774
        %v780 = vmul.f32 1.0, %v779
        %v781 = vadd.f32 %v737, %v657
        %v782 = vadd.f32 %v739, %v657
        %785 = vrot.lane.b32.xlu0 %v781, 64
        %v786 = vpop.permute.xlu0 %785
        %787 = vrot.lane.b32.xlu0 %v782, 64
        %v788 = vpop.permute.xlu0 %787
        %v791 = vmul.f32 %v765, %v786
        %v792 = vmul.f32 %v780, %v788
        %795 = vrot.lane.b32.xlu0 %v791, 64
        %v796 = vpop.permute.xlu0 %795
        %797 = vrot.lane.b32.xlu0 %v792, 64
        %v798 = vpop.permute.xlu0 %797
        %v801 = vadd.f32 %v718, %v796
        %v802 = vadd.f32 %v719, %v798
        %v803 = vtanh.pop %v801
        %v804 = vtanh.pop %v802
        %v805 = vsub.f32 1.0, %v765
        %v806 = vsub.f32 1.0, %v780
        %809 = vrot.lane.b32.xlu0 %v803, 96
        %v810 = vpop.permute.xlu0 %809
        %811 = vrot.lane.b32.xlu0 %v804, 96
        %v812 = vpop.permute.xlu0 %811
        %v815 = vmul.f32 %v805, %v810
        %v816 = vmul.f32 %v806, %v812
        %v817 = vmul.f32 %v765, %v705
        %v818 = vmul.f32 %v780, %v706
        %v819 = vadd.f32 %v815, %v817
        %v820 = vadd.f32 %v816, %v818
        %823 = vrot.lane.b32.xlu0 %v819, 96
        %v824 = vpop.permute.xlu0 %823
        %825 = vrot.lane.b32.xlu0 %v820, 96
        %v826 = vpop.permute.xlu0 %825
        %s829 = scalar_lea.vmem [#allocation3], 16
        %830 = vst.msk [vmem:[%s829] sm:$0xff] %vm524, %v824
        %831 = vst.msk [vmem:[%s829 + $0x8] sm:$0xff] %vm524, %v826
        %s832 = scalar_lea.vmem [#allocation2], 32
        %v833 = vld [vmem:[%s832] sm:$0xff]
        %v834 = vld [vmem:[%s832 + $0x8] sm:$0xff]
        %v835 = vpack.c.bf16 %v820, %v819
        %837 = vrot.lane.b32.xlu0 %v835, 96
        %v838 = vpop.permute.xlu0 %837
        %v840 = vsel %vm524, %v838, 0
        %842 = vmatpush.bf16.msra.mxu0 0
        %843 = vmatpush.bf16.msra.mxu0 0
        %844 = vmatpush.bf16.msra.mxu0 0
        %845 = vmatpush.bf16.msra.mxu0 0
        %846 = vmatpush.bf16.msra.mxu0 0
        %847 = vmatpush.bf16.msra.mxu0 0
        %848 = vmatpush.bf16.msra.mxu0 %v596
        %849 = vmatpush.bf16.msra.mxu0 %v595
        %850 = vmatmul.bf16.gmra.mxu0 %v840
        %v851 = vpop.f32.mrf.mxu0
        %v852 = vadd.f32 0.0, %v851
        %v853 = vpop.f32.mrf.mxu0
        %v854 = vadd.f32 0.0, %v853
        %855 = vdwg.mxu0
        %v856 = vadd.f32 %v833, %v852
        %v857 = vadd.f32 %v834, %v854
        %v858 = vxor.u32 %v856, 2147483648
        %v859 = vxor.u32 %v857, 2147483648
        %v860 = vmul.f32 %v858, 1.442695
        %v861 = vpow.pop %v860
        %v862 = vmul.f32 %v859, 1.442695
        %v863 = vpow.pop %v862
        %v864 = vadd.f32 %v861, 1.0
        %v865 = vadd.f32 %v863, 1.0
        %v866 = vrcp.pop %v864
        %v867 = vmul.f32 %v864, %v866
        %v868 = vsub.f32 1.0, %v867
        %v869 = vmul.f32 %v866, %v868
        %v870 = vadd.f32 %v866, %v869
        %vm871 = vweird.f32 %v864
        %vm872 = vweird.f32 %v866
        %vm873 = vmor %vm871, %vm872
        %v874 = vsel %vm873, %v866, %v870
        %v875 = vand.u32 2147483647, %v864
        %vm876 = vcmp.eq.f32.partialorder %v875, 8.507059e+37
        %v877 = vand.u32 %v864, 2147483648
        %v878 = vor.u32 1.1754944e-38, %v877
        %v879 = vsel %vm876, %v878, %v874
        %v880 = vmul.f32 1.0, %v879
        %v881 = vrcp.pop %v865
        %v882 = vmul.f32 %v865, %v881
        %v883 = vsub.f32 1.0, %v882
        %v884 = vmul.f32 %v881, %v883
        %v885 = vadd.f32 %v881, %v884
        %vm886 = vweird.f32 %v865
        %vm887 = vweird.f32 %v881
        %vm888 = vmor %vm886, %vm887
        %v889 = vsel %vm888, %v881, %v885
        %v890 = vand.u32 2147483647, %v865
        %vm891 = vcmp.eq.f32.partialorder %v890, 8.507059e+37
        %v892 = vand.u32 %v865, 2147483648
        %v893 = vor.u32 1.1754944e-38, %v892
        %v894 = vsel %vm891, %v893, %v889
        %v895 = vmul.f32 1.0, %v894
        %v896 = vadd.f32 %v852, %v657
        %v897 = vadd.f32 %v854, %v657
        %900 = vrot.lane.b32.xlu0 %v896, 64
        %v901 = vpop.permute.xlu0 %900
        %902 = vrot.lane.b32.xlu0 %v897, 64
        %v903 = vpop.permute.xlu0 %902
        %v906 = vmul.f32 %v880, %v901
        %v907 = vmul.f32 %v895, %v903
        %910 = vrot.lane.b32.xlu0 %v906, 64
        %v911 = vpop.permute.xlu0 %910
        %912 = vrot.lane.b32.xlu0 %v907, 64
        %v913 = vpop.permute.xlu0 %912
        %v916 = vadd.f32 %v833, %v911
        %v917 = vadd.f32 %v834, %v913
        %v918 = vtanh.pop %v916
        %v919 = vtanh.pop %v917
        %v920 = vsub.f32 1.0, %v880
        %v921 = vsub.f32 1.0, %v895
        %924 = vrot.lane.b32.xlu0 %v918, 96
        %v925 = vpop.permute.xlu0 %924
        %926 = vrot.lane.b32.xlu0 %v919, 96
        %v927 = vpop.permute.xlu0 %926
        %v930 = vmul.f32 %v920, %v925
        %v931 = vmul.f32 %v921, %v927
        %v932 = vmul.f32 %v880, %v819
        %v933 = vmul.f32 %v895, %v820
        %v934 = vadd.f32 %v930, %v932
        %v935 = vadd.f32 %v931, %v933
        %938 = vrot.lane.b32.xlu0 %v934, 96
        %v939 = vpop.permute.xlu0 %938
        %940 = vrot.lane.b32.xlu0 %v935, 96
        %v941 = vpop.permute.xlu0 %940
        %s944 = scalar_lea.vmem [#allocation3], 32
        %945 = vst.msk [vmem:[%s944] sm:$0xff] %vm524, %v939
        %946 = vst.msk [vmem:[%s944 + $0x8] sm:$0xff] %vm524, %v941
        %s947 = scalar_lea.vmem [#allocation2], 48
        %v948 = vld [vmem:[%s947] sm:$0xff]
        %v949 = vld [vmem:[%s947 + $0x8] sm:$0xff]
        %v950 = vpack.c.bf16 %v935, %v934
        %952 = vrot.lane.b32.xlu0 %v950, 96
        %v953 = vpop.permute.xlu0 %952
        %v955 = vsel %vm524, %v953, 0
        %957 = vmatpush.bf16.msra.mxu0 0
        %958 = vmatpush.bf16.msra.mxu0 0
        %959 = vmatpush.bf16.msra.mxu0 0
        %960 = vmatpush.bf16.msra.mxu0 0
        %961 = vmatpush.bf16.msra.mxu0 0
        %962 = vmatpush.bf16.msra.mxu0 0
        %963 = vmatpush.bf16.msra.mxu0 %v596
        %964 = vmatpush.bf16.msra.mxu0 %v595
        %965 = vmatmul.bf16.gmra.mxu0 %v955
        %v966 = vpop.f32.mrf.mxu0
        %v967 = vadd.f32 0.0, %v966
        %v968 = vpop.f32.mrf.mxu0
        %v969 = vadd.f32 0.0, %v968
        %970 = vdwg.mxu0
        %v971 = vadd.f32 %v948, %v967
        %v972 = vadd.f32 %v949, %v969
        %v973 = vxor.u32 %v971, 2147483648
        %v974 = vxor.u32 %v972, 2147483648
        %v975 = vmul.f32 %v973, 1.442695
        %v976 = vpow.pop %v975
        %v977 = vmul.f32 %v974, 1.442695
        %v978 = vpow.pop %v977
        %v979 = vadd.f32 %v976, 1.0
        %v980 = vadd.f32 %v978, 1.0
        %v981 = vrcp.pop %v979
        %v982 = vmul.f32 %v979, %v981
        %v983 = vsub.f32 1.0, %v982
        %v984 = vmul.f32 %v981, %v983
        %v985 = vadd.f32 %v981, %v984
        %vm986 = vweird.f32 %v979
        %vm987 = vweird.f32 %v981
        %vm988 = vmor %vm986, %vm987
        %v989 = vsel %vm988, %v981, %v985
        %v990 = vand.u32 2147483647, %v979
        %vm991 = vcmp.eq.f32.partialorder %v990, 8.507059e+37
        %v992 = vand.u32 %v979, 2147483648
        %v993 = vor.u32 1.1754944e-38, %v992
        %v994 = vsel %vm991, %v993, %v989
        %v995 = vmul.f32 1.0, %v994
        %v996 = vrcp.pop %v980
        %v997 = vmul.f32 %v980, %v996
        %v998 = vsub.f32 1.0, %v997
        %v999 = vmul.f32 %v996, %v998
        %v1000 = vadd.f32 %v996, %v999
        %vm1001 = vweird.f32 %v980
        %vm1002 = vweird.f32 %v996
        %vm1003 = vmor %vm1001, %vm1002
        %v1004 = vsel %vm1003, %v996, %v1000
        %v1005 = vand.u32 2147483647, %v980
        %vm1006 = vcmp.eq.f32.partialorder %v1005, 8.507059e+37
        %v1007 = vand.u32 %v980, 2147483648
        %v1008 = vor.u32 1.1754944e-38, %v1007
        %v1009 = vsel %vm1006, %v1008, %v1004
        %v1010 = vmul.f32 1.0, %v1009
        %v1011 = vadd.f32 %v967, %v657
        %v1012 = vadd.f32 %v969, %v657
        %1015 = vrot.lane.b32.xlu0 %v1011, 64
        %v1016 = vpop.permute.xlu0 %1015
        %1017 = vrot.lane.b32.xlu0 %v1012, 64
        %v1018 = vpop.permute.xlu0 %1017
        %v1021 = vmul.f32 %v995, %v1016
        %v1022 = vmul.f32 %v1010, %v1018
        %1025 = vrot.lane.b32.xlu0 %v1021, 64
        %v1026 = vpop.permute.xlu0 %1025
        %1027 = vrot.lane.b32.xlu0 %v1022, 64
        %v1028 = vpop.permute.xlu0 %1027
        %v1031 = vadd.f32 %v948, %v1026
        %v1032 = vadd.f32 %v949, %v1028
        %v1033 = vtanh.pop %v1031
        %v1034 = vtanh.pop %v1032
        %v1035 = vsub.f32 1.0, %v995
        %v1036 = vsub.f32 1.0, %v1010
        %1039 = vrot.lane.b32.xlu0 %v1033, 96
        %v1040 = vpop.permute.xlu0 %1039
        %1041 = vrot.lane.b32.xlu0 %v1034, 96
        %v1042 = vpop.permute.xlu0 %1041
        %v1045 = vmul.f32 %v1035, %v1040
        %v1046 = vmul.f32 %v1036, %v1042
        %v1047 = vmul.f32 %v995, %v934
        %v1048 = vmul.f32 %v1010, %v935
        %v1049 = vadd.f32 %v1045, %v1047
        %v1050 = vadd.f32 %v1046, %v1048
        %1053 = vrot.lane.b32.xlu0 %v1049, 96
        %v1054 = vpop.permute.xlu0 %1053
        %1055 = vrot.lane.b32.xlu0 %v1050, 96
        %v1056 = vpop.permute.xlu0 %1055
        %s1059 = scalar_lea.vmem [#allocation3], 48
        %1060 = vst.msk [vmem:[%s1059] sm:$0xff] %vm524, %v1054
        %1061 = vst.msk [vmem:[%s1059 + $0x8] sm:$0xff] %vm524, %v1056
        %1062 = vst.msk [vmem:[#allocation4] sm:$0xff] %vm524, %v1054
        %1063 = vst.msk [vmem:[#allocation4 + $0x8] sm:$0xff] %vm524, %v1056
        %v1064 = vld [vmem:[#allocation3] sm:$0xff]
        %v1065 = vld [vmem:[#allocation3 + $0x8] sm:$0xff]
        %v1066 = vld [vmem:[#allocation3 + $0x10] sm:$0xff]
        %v1067 = vld [vmem:[#allocation3 + $0x18] sm:$0xff]
        %v1068 = vld [vmem:[#allocation3 + $0x20] sm:$0xff]
        %v1069 = vld [vmem:[#allocation3 + $0x28] sm:$0xff]
        %v1070 = vld [vmem:[#allocation3 + $0x30] sm:$0xff]
        %v1071 = vld [vmem:[#allocation3 + $0x38] sm:$0xff]
        %v1072 = vpack.c.bf16 %v1065, %v1064
        %v1073 = vpack.c.bf16 %v1067, %v1066
        %v1074 = vpack.c.bf16 %v1069, %v1068
        %v1075 = vpack.c.bf16 %v1071, %v1070
        %v1076 = vld [vmem:[#allocation13] sm:$0xf]
        %v1077 = vld [vmem:[#allocation13 + $0x4] sm:$0xf]
        %v1078 = vld [vmem:[#allocation13 + $0x8] sm:$0xf]
        %v1079 = vld [vmem:[#allocation13 + $0xc] sm:$0xf]
        %v1080 = vld [vmem:[%s7] sm:$0x1]
        %v1082 = vperm.slane %v1080, 0
        %v1088 = vunpack.c.l.b16 %v1076
        %v1089 = vunpack.c.l.b16 %v1077
        %v1090 = vunpack.c.l.b16 %v1078
        %v1091 = vunpack.c.l.b16 %v1079
        %v1092 = vpack.c.b16 %v1089, %v1088
        %v1093 = vpack.c.b16 %v1091, %v1090
        %v1097 = vsel %vm524, %v1072, 0
        %v1100 = vsel %vm524, %v1073, 0
        %v1103 = vsel %vm524, %v1074, 0
        %v1106 = vsel %vm524, %v1075, 0
        %1108 = vmatpush.bf16.msra.mxu0 0
        %1109 = vmatpush.bf16.msra.mxu0 0
        %1110 = vmatpush.bf16.msra.mxu0 0
        %1111 = vmatpush.bf16.msra.mxu0 0
        %1112 = vmatpush.bf16.msra.mxu0 0
        %1113 = vmatpush.bf16.msra.mxu0 0
        %1114 = vmatpush.bf16.msra.mxu0 %v1093
        %1115 = vmatpush.bf16.msra.mxu0 %v1092
        %1116 = vmatmul.bf16.gmra.mxu0 %v1097
        %v1117 = vpop.f32.mrf.mxu0
        %v1118 = vadd.f32 %v1082, %v1117
        %v1119 = vpop.f32.mrf.mxu0
        %v1120 = vadd.f32 %v1082, %v1119
        %1121 = vmatmul.bf16.gmra.mxu0 %v1100
        %v1122 = vpop.f32.mrf.mxu0
        %v1123 = vadd.f32 %v1082, %v1122
        %v1124 = vpop.f32.mrf.mxu0
        %v1125 = vadd.f32 %v1082, %v1124
        %1126 = vmatmul.bf16.gmra.mxu0 %v1103
        %v1127 = vpop.f32.mrf.mxu0
        %v1128 = vadd.f32 %v1082, %v1127
        %v1129 = vpop.f32.mrf.mxu0
        %v1130 = vadd.f32 %v1082, %v1129
        %1131 = vmatmul.bf16.gmra.mxu0 %v1106
        %v1132 = vpop.f32.mrf.mxu0
        %v1133 = vadd.f32 %v1082, %v1132
        %v1134 = vpop.f32.mrf.mxu0
        %v1135 = vadd.f32 %v1082, %v1134
        %1136 = vdwg.mxu0
        %v1137 = vtanh.pop %v1118
        %v1138 = vtanh.pop %v1120
        %v1139 = vtanh.pop %v1123
        %v1140 = vtanh.pop %v1125
        %v1141 = vtanh.pop %v1128
        %v1142 = vtanh.pop %v1130
        %v1143 = vtanh.pop %v1133
        %v1144 = vtanh.pop %v1135
        %1145 = vst.msk [vmem:[%s451] sm:$0xff] %vm524, %v1064
        %1146 = vst.msk [vmem:[%s451 + $0x8] sm:$0xff] %vm524, %v1065
        %1147 = vst.msk [vmem:[%s451 + $0x10] sm:$0xff] %vm524, %v1066
        %1148 = vst.msk [vmem:[%s451 + $0x18] sm:$0xff] %vm524, %v1067
        %1149 = vst.msk [vmem:[%s451 + $0x20] sm:$0xff] %vm524, %v1068
        %1150 = vst.msk [vmem:[%s451 + $0x28] sm:$0xff] %vm524, %v1069
        %1151 = vst.msk [vmem:[%s451 + $0x30] sm:$0xff] %vm524, %v1070
        %1152 = vst.msk [vmem:[%s451 + $0x38] sm:$0xff] %vm524, %v1071
        %1153 = vst.msk [vmem:[%s458] sm:$0xff] %vm524, %v1137
        %1154 = vst.msk [vmem:[%s458 + $0x8] sm:$0xff] %vm524, %v1138
        %1155 = vst.msk [vmem:[%s458 + $0x10] sm:$0xff] %vm524, %v1139
        %1156 = vst.msk [vmem:[%s458 + $0x18] sm:$0xff] %vm524, %v1140
        %1157 = vst.msk [vmem:[%s458 + $0x20] sm:$0xff] %vm524, %v1141
        %1158 = vst.msk [vmem:[%s458 + $0x28] sm:$0xff] %vm524, %v1142
        %1159 = vst.msk [vmem:[%s458 + $0x30] sm:$0xff] %vm524, %v1143
        %1160 = vst.msk [vmem:[%s458 + $0x38] sm:$0xff] %vm524, %v1144
        %s1161 = sand.u32 %s234, 1
        %s1162 = scalar_lea.sflag [#allocation7], %s1161
        %s1163 = sand.u32 %s234, 1
        %s1164 = smul.addr %s1163, 64
        %s1165 = scalar_lea.vmem [#allocation14], %s1164
        %s1166 = sand.u32 %s262, 1
        %s1167 = scalar_lea.sflag [#allocation16], %s1166
        %s1168 = sand.u32 %s262, 1
        %s1169 = smul.addr %s1168, 64
        %s1170 = scalar_lea.vmem [#allocation15], %s1169
        // Predicated region
        $region77: #{tpu_custom_call.1} parent=51 // pred_check
          %p1171 = pneg %p244
        $region78: #{tpu_custom_call.1} parent=51 // pred_check_branch
          %1173 = sbr.rel (%p1171) target = $region80
        $region79: #{tpu_custom_call.1} parent=51 // pred_region
          %s1174 = smul.u32 4, %s37
          %s1175 = smul.u32 2, %s36
          %1177 = vsyncadd %s1162, 0
          %s1178 = smul.addr %s1174, 2
          %s1179 = sadd.s32 %s1175, %s1178
          %s1180 = smul.addr %s1179, 8
          %s1181 = scalar_lea.hbm %s8, %s1180
          %s1182 = sshll.u32 %s1165, 4
          %s1183 = int_to_ptr.vmem [resolvable:$true] %s1182
          %s1184 = sshll.u32 %s1181, 4
          %s1185 = int_to_ptr.hbm [resolvable:$true] %s1184
          %1190 = dma.vmem_to_hbm [thread:$0]  %s1183, 1024, %s1185, %s1162, 128, 128, 8
        $region80: #{tpu_custom_call.1} parent=51 // pred_fallthru
          _
        // Predicated region
        $region81: #{tpu_custom_call.1} parent=51 // pred_check
          %p1191 = pneg %p272
        $region82: #{tpu_custom_call.1} parent=51 // pred_check_branch
          %1193 = sbr.rel (%p1191) target = $region84
        $region83: #{tpu_custom_call.1} parent=51 // pred_region
          %s1194 = smul.u32 4, %s37
          %s1195 = smul.u32 2, %s36
          %1197 = vsyncadd %s1167, 0
          %s1198 = smul.addr %s1194, 2
          %s1199 = sadd.s32 %s1195, %s1198
          %s1200 = smul.addr %s1199, 8
          %s1201 = scalar_lea.hbm %s9, %s1200
          %s1202 = sshll.u32 %s1170, 4
          %s1203 = int_to_ptr.vmem [resolvable:$true] %s1202
          %s1204 = sshll.u32 %s1201, 4
          %s1205 = int_to_ptr.hbm [resolvable:$true] %s1204
          %1210 = dma.vmem_to_hbm [thread:$0]  %s1203, 1024, %s1205, %s1167, 128, 128, 8
        $region84: #{tpu_custom_call.1} parent=51 // pred_fallthru
          _
      $region52: #{tpu_custom_call.1} parent=5 // pred_fallthru
        _
      %p1211 = scmp.le.s32.totalorder 2, %s27
      // Predicated region
      $region85: #{tpu_custom_call.1} parent=5 // pred_check
        %p1212 = pneg %p1211
      $region86: #{tpu_custom_call.1} parent=5 // pred_check_branch
        %1214 = sbr.rel (%p1212) target = $region88
      $region87: #{tpu_custom_call.1} parent=5 // pred_region
        %s1215 = ssub.s32 %s27, 2
        // Predicated region
        $region89: #{tpu_custom_call.1} parent=87 // pred_check
          %p1216 = pneg %p250
        $region90: #{tpu_custom_call.1} parent=87 // pred_check_branch
          %1218 = sbr.rel (%p1216) target = $region92
        $region91: #{tpu_custom_call.1} parent=87 // pred_region
          %s1219 = sand.u32 %s235, 1
          %s1220 = scalar_lea.sflag [#allocation7], %s1219
          %s1221 = sand.u32 %s235, 1
          %s1222 = smul.addr %s1221, 64
          %s1223 = scalar_lea.vmem [#allocation14], %s1222
          %1225 = dma.done %s1220, 1024
        $region92: #{tpu_custom_call.1} parent=87 // pred_fallthru
          _
        // Predicated region
        $region93: #{tpu_custom_call.1} parent=87 // pred_check
          %p1226 = pneg %p278
        $region94: #{tpu_custom_call.1} parent=87 // pred_check_branch
          %1228 = sbr.rel (%p1226) target = $region96
        $region95: #{tpu_custom_call.1} parent=87 // pred_region
          %s1229 = sand.u32 %s263, 1
          %s1230 = scalar_lea.sflag [#allocation16], %s1229
          %s1231 = sand.u32 %s263, 1
          %s1232 = smul.addr %s1231, 64
          %s1233 = scalar_lea.vmem [#allocation15], %s1232
          %1235 = dma.done %s1230, 1024
        $region96: #{tpu_custom_call.1} parent=87 // pred_fallthru
          _
      $region88: #{tpu_custom_call.1} parent=5 // pred_fallthru
        _
    $region6: #{tpu_custom_call.1} parent=1 // loop_footer
      %s31 = sadd.s32 1, %s27
    $region7: #{tpu_custom_call.1} parent=1 // loop_footer_branch
      %26 = sbr.rel target = $region3
    $region8: #{tpu_custom_call.1} parent=1 // loop_exit
      _
    %1236 = vsyncpa [#allocation6], 1
    %s1237 = scalar_lea.sflag [#allocation6], 1
    %1238 = vsyncpa %s1237, 1
    %1239 = vsyncpa [#allocation9], 1
    %1240 = vsyncpa [#allocation12], 1
    %1241 = vsyncpa [#allocation7], 1
    %s1242 = scalar_lea.sflag [#allocation7], 1
    %1243 = vsyncpa %s1242, 1
    %1244 = vsyncpa [#allocation16], 1
    %s1245 = scalar_lea.sflag [#allocation16], 1
    %1246 = vsyncpa %s1245, 1

</llo_original>
